<compile_context>
chip_gen: v6e
topology: v6e:2x2x1
jax: 0.10.0
libtpu: 0.0.40
codegen_flags: <defaults>
</compile_context>

<pallas_src>
import jax
import jax.numpy as jnp
import numpy as np
from jax.experimental import pallas as pl
from jax.experimental.pallas import tpu as pltpu


H1, H2 = 400, 300            # logical hidden sizes (PyTorch module)
H1_PAD, H2_PAD = 512, 384    # lane-aligned padded hidden sizes
IN_PAD = 128                 # packed [state | action | 0] input width
TB_MAX = 512                 # batch tile cap (sweep 256/512; 1024 OK on v7x)


# ----------------------------------------------------------------------------
# Pallas kernel: full Critic forward for one batch tile (weights resident)
# ----------------------------------------------------------------------------
def critic_kernel(x_ref, w1_ref, b1_ref, w2s_ref, w2a_ref, b2_ref,
                  w3t_ref, b3_ref, out_ref):
    # Packed input tile: (TB, 128) f32, cast to bf16 in-kernel (VPU, hidden).
    x = x_ref[...].astype(jnp.bfloat16)

    # Layer 1: relu(state @ W1 + b1).  Action/pad rows of W1 are zero, so the
    # packed input can be used directly.
    h1 = jnp.dot(x, w1_ref[...], preferred_element_type=jnp.float32) + b1_ref[...]
    h1 = jnp.maximum(h1, 0.0).astype(jnp.bfloat16)                 # (TB, 512)

    # Layer 2: relu(concat([h1, action]) @ W2 + b2) as an exact split matmul.
    # W2a is placed on the action rows of the packed layout (state rows zero).
    h2 = (jnp.dot(h1, w2s_ref[...], preferred_element_type=jnp.float32)
          + jnp.dot(x, w2a_ref[...], preferred_element_type=jnp.float32)
          + b2_ref[...])
    h2 = jnp.maximum(h2, 0.0)                                      # (TB, 384) f32

    # Layer 3, transposed: q_row = W3^T @ h2^T.  h2^T goes through the idle
    # XLU; output is a lane-dense (8, TB) block with the real q in row 0.
    h2t = h2.T.astype(jnp.bfloat16)                                # (384, TB)
    q8 = jnp.dot(w3t_ref[...], h2t, preferred_element_type=jnp.float32)
    out_ref[...] = q8 + b3_ref[0]                                  # (8, TB)


def _round_up(x, m):
    return -(-x // m) * m


def critic_forward(state, action, params):
    """state: [B, state_dim] f32, action: [B, action_dim] f32 -> q: [B, 1] f32"""
    B, S = state.shape
    A = action.shape[1]
    assert S + A <= IN_PAD, "packed-input path assumes state_dim+action_dim <= 128"
    w1p, b1p, w2sp, w2ap, b2p, w3tp, b3s = params

    # Batch tiling: TB multiple of 128 (unmasked tiles), capped at TB_MAX.
    TB = min(TB_MAX, _round_up(max(B, 1), 128))
    B_pad = _round_up(B, TB)

    # One packed lane-aligned f32 input: cols [0:S)=state, [S:S+A)=action.
    x = jnp.pad(jnp.concatenate([state, action], axis=1),
                ((0, B_pad - B), (0, IN_PAD - S - A)))

    grid = (B_pad // TB,)

    out = pl.pallas_call(
        critic_kernel,
        out_shape=jax.ShapeDtypeStruct((8, B_pad), jnp.float32),
        grid=grid,
        in_specs=[
            pl.BlockSpec((TB, IN_PAD), lambda i: (i, 0)),           # packed input
            pl.BlockSpec((IN_PAD, H1_PAD), lambda i: (0, 0)),       # W1 (resident)
            pl.BlockSpec((1, H1_PAD), lambda i: (0, 0)),            # b1
            pl.BlockSpec((H1_PAD, H2_PAD), lambda i: (0, 0)),       # W2[:400]
            pl.BlockSpec((IN_PAD, H2_PAD), lambda i: (0, 0)),       # W2[400:] (packed rows)
            pl.BlockSpec((1, H2_PAD), lambda i: (0, 0)),            # b2
            pl.BlockSpec((8, H2_PAD), lambda i: (0, 0)),            # W3^T (row 0 real)
            pl.BlockSpec(memory_space=pltpu.MemorySpace.SMEM),      # b3 scalar
        ],
        out_specs=pl.BlockSpec((8, TB), lambda i: (0, i)),
        compiler_params=pltpu.CompilerParams(
            dimension_semantics=("parallel",)),
    )(x, w1p, b1p, w2sp, w2ap, b2p, w3tp, b3s)

    # Real q lives in row 0; real rows are [:B].
    return out[0, :B].reshape(B, 1)


# ----------------------------------------------------------------------------
# Deterministic parameter init (mimics nn.Linear default U(-1/sqrt(fan_in),..))
# Weights are stored pre-transposed as [in, out], bf16-quantized, and
# zero-padded to lane-aligned shapes (padding is exact: extra rows/cols = 0).
# ----------------------------------------------------------------------------
def init_params(key, state_dim, action_dim):
    def linear(key, fan_in, fan_out):
        kw, kb = jax.random.split(key)
        bound = 1.0 / np.sqrt(fan_in)
        w = jax.random.uniform(kw, (fan_in, fan_out), jnp.float32, -bound, bound)
        b = jax.random.uniform(kb, (1, fan_out), jnp.float32, -bound, bound)
        return w, b

    k1, k2, k3 = jax.random.split(key, 3)
    w1, b1 = linear(k1, state_dim, H1)
    w2, b2 = linear(k2, H1 + action_dim, H2)
    w3, b3 = linear(k3, H2, 1)

    # bf16-quantize weights (kernel weight dtype); biases stay f32.
    w1_q = w1.astype(jnp.bfloat16)
    w2_q = w2.astype(jnp.bfloat16)
    w3_q = w3.astype(jnp.bfloat16)
    w2s_q, w2a_q = w2_q[:H1], w2_q[H1:]

    def pad2(x, r, c):
        return jnp.pad(x, ((0, r - x.shape[0]), (0, c - x.shape[1])))

    # W1 on the packed layout: rows [0:S) real, action/pad rows zero.
    w1_p = pad2(w1_q, IN_PAD, H1_PAD)
    # W2_action on the packed layout: rows [S:S+A) real, others zero.
    w2a_p = jnp.zeros((IN_PAD, H2_PAD), jnp.bfloat16)
    w2a_p = w2a_p.at[state_dim:state_dim + action_dim, :H2].set(w2a_q)
    w2s_p = pad2(w2s_q, H1_PAD, H2_PAD)
    b1_p = pad2(b1, 1, H1_PAD)
    b2_p = pad2(b2, 1, H2_PAD)
    # W3 transposed to a (8, H2_PAD) row block: row 0 real, rows 1..7 zero.
    w3t_p = pad2(w3_q.T, 8, H2_PAD)
    b3_s = b3.reshape(1)                       # (1,) f32 scalar for SMEM

    kernel_params = (w1_p, b1_p, w2s_p, w2a_p, b2_p, w3t_p, b3_s)

    # Reference params: same bf16-quantized weights, upcast to f32, unsplit
    # (matches the PyTorch graph exactly).
    ref_params = (w1_q.astype(jnp.float32), b1,
                  w2_q.astype(jnp.float32), b2,
                  w3_q.astype(jnp.float32), b3)
    return kernel_params, ref_params


# Pure-JAX reference mirroring the kernel's bf16-weight / f32-accumulate math.
def critic_ref(state, action, ref_params):
    w1, b1, w2, b2, w3, b3 = ref_params
    s = state.astype(jnp.bfloat16).astype(jnp.float32)
    a = action.astype(jnp.bfloat16).astype(jnp.float32)
    h1 = jax.nn.relu(s @ w1 + b1)
    h1 = h1.astype(jnp.bfloat16).astype(jnp.float32)
    comb = jnp.concatenate([h1, a], axis=1)
    h2 = jax.nn.relu(comb @ w2 + b2)
    h2 = h2.astype(jnp.bfloat16).astype(jnp.float32)
    return h2 @ w3 + b3


if __name__ == "__main__":
    state_dim, action_dim = 16, 4

    key = jax.random.PRNGKey(0)
    k_s, k_a, k_p = jax.random.split(key, 3)
    params, ref_params = init_params(k_p, state_dim, action_dim)

    # Small batch (spec-sized): B=2, padded to one 128-row tile inside wrapper.
    B = 2
    state = jax.random.normal(k_s, (B, state_dim), jnp.float32)
    action = jax.random.normal(k_a, (B, action_dim), jnp.float32)

    q = jax.block_until_ready(critic_forward(state, action, params))
    q_ref = critic_ref(state, action, ref_params)
    np.testing.assert_allclose(np.asarray(q), np.asarray(q_ref),
                               rtol=1e-3, atol=1e-3)

    # Larger, non-multiple batch: exercises TB=512, a 2-step "parallel" grid
    # (weights resident across tiles) and the padded-tail slicing.
    B2 = 1000
    k_s2, k_a2 = jax.random.split(jax.random.PRNGKey(1))
    state2 = jax.random.normal(k_s2, (B2, state_dim), jnp.float32)
    action2 = jax.random.normal(k_a2, (B2, action_dim), jnp.float32)

    q2 = jax.block_until_ready(critic_forward(state2, action2, params))
    q2_ref = critic_ref(state2, action2, ref_params)
    np.testing.assert_allclose(np.asarray(q2), np.asarray(q2_ref),
                               rtol=1e-3, atol=1e-3)

    print("KERNEL_OK")
</pallas_src>

<mosaic_0001>
module attributes {stable_mosaic.version = 11 : i64} {
  func.func @critic_kernel(%arg0: i32, %arg1: memref<128x128xf32, #tpu.memory_space<vmem>>, %arg2: memref<128x512xbf16, #tpu.memory_space<vmem>>, %arg3: memref<1x512xf32, #tpu.memory_space<vmem>>, %arg4: memref<512x384xbf16, #tpu.memory_space<vmem>>, %arg5: memref<128x384xbf16, #tpu.memory_space<vmem>>, %arg6: memref<1x384xf32, #tpu.memory_space<vmem>>, %arg7: memref<8x384xbf16, #tpu.memory_space<vmem>>, %arg8: memref<1xf32, #tpu.memory_space<smem>>, %arg9: memref<8x128xf32, #tpu.memory_space<vmem>>) attributes {dimension_semantics = [#tpu.dimension_semantics<parallel>], iteration_bounds = array<i64: 1>, scalar_prefetch = 0 : i64, scratch_operands = 0 : i64, tpu.core_type = #tpu.core_type<tc>, window_params = [{transform_indices = @transform_0, window_bounds = array<i64: 128, 128>}, {pipeline_mode = #tpu.pipeline_mode<synchronous>, transform_indices = @transform_1, window_bounds = array<i64: 128, 512>}, {pipeline_mode = #tpu.pipeline_mode<synchronous>, transform_indices = @transform_2, window_bounds = array<i64: 1, 512>}, {pipeline_mode = #tpu.pipeline_mode<synchronous>, transform_indices = @transform_3, window_bounds = array<i64: 512, 384>}, {pipeline_mode = #tpu.pipeline_mode<synchronous>, transform_indices = @transform_4, window_bounds = array<i64: 128, 384>}, {pipeline_mode = #tpu.pipeline_mode<synchronous>, transform_indices = @transform_5, window_bounds = array<i64: 1, 384>}, {pipeline_mode = #tpu.pipeline_mode<synchronous>, transform_indices = @transform_6, window_bounds = array<i64: 8, 384>}, {transform_indices = @transform_7, window_bounds = array<i64: 1>}, {transform_indices = @transform_8, window_bounds = array<i64: 8, 128>}]} {
    %c0 = arith.constant 0 : index
    %c0_0 = arith.constant 0 : index
    %0 = vector.load %arg1[%c0, %c0_0] : memref<128x128xf32, #tpu.memory_space<vmem>>, vector<128x128xf32>
    %1 = arith.truncf %0 : vector<128x128xf32> to vector<128x128xbf16>
    %c0_1 = arith.constant 0 : index
    %c0_2 = arith.constant 0 : index
    %2 = vector.load %arg2[%c0_1, %c0_2] : memref<128x512xbf16, #tpu.memory_space<vmem>>, vector<128x512xbf16>
    %cst = arith.constant dense<0.000000e+00> : vector<128x512xf32>
    %3 = tpu.matmul %1, %2, %cst {dimension_numbers = #tpu.dot_dimension_numbers<[1], [0], [0], [1], [0, 0, 1, 1], [], []>} : vector<128x128xbf16>, vector<128x512xbf16>, vector<128x512xf32> -> vector<128x512xf32>
    %c0_3 = arith.constant 0 : index
    %c0_4 = arith.constant 0 : index
    %4 = vector.load %arg3[%c0_3, %c0_4] : memref<1x512xf32, #tpu.memory_space<vmem>>, vector<1x512xf32>
    %5 = vector.broadcast %4 : vector<1x512xf32> to vector<128x512xf32>
    %6 = arith.addf %3, %5 : vector<128x512xf32>
    %cst_5 = arith.constant 0.000000e+00 : f32
    %7 = vector.broadcast %cst_5 : f32 to vector<128x512xf32>
    %8 = arith.maximumf %6, %7 : vector<128x512xf32>
    %9 = arith.truncf %8 : vector<128x512xf32> to vector<128x512xbf16>
    %c0_6 = arith.constant 0 : index
    %c0_7 = arith.constant 0 : index
    %10 = vector.load %arg4[%c0_6, %c0_7] : memref<512x384xbf16, #tpu.memory_space<vmem>>, vector<512x384xbf16>
    %cst_8 = arith.constant dense<0.000000e+00> : vector<128x384xf32>
    %11 = tpu.matmul %9, %10, %cst_8 {dimension_numbers = #tpu.dot_dimension_numbers<[1], [0], [0], [1], [0, 0, 1, 1], [], []>} : vector<128x512xbf16>, vector<512x384xbf16>, vector<128x384xf32> -> vector<128x384xf32>
    %c0_9 = arith.constant 0 : index
    %c0_10 = arith.constant 0 : index
    %12 = vector.load %arg5[%c0_9, %c0_10] : memref<128x384xbf16, #tpu.memory_space<vmem>>, vector<128x384xbf16>
    %cst_11 = arith.constant dense<0.000000e+00> : vector<128x384xf32>
    %13 = tpu.matmul %1, %12, %cst_11 {dimension_numbers = #tpu.dot_dimension_numbers<[1], [0], [0], [1], [0, 0, 1, 1], [], []>} : vector<128x128xbf16>, vector<128x384xbf16>, vector<128x384xf32> -> vector<128x384xf32>
    %14 = arith.addf %11, %13 : vector<128x384xf32>
    %c0_12 = arith.constant 0 : index
    %c0_13 = arith.constant 0 : index
    %15 = vector.load %arg6[%c0_12, %c0_13] : memref<1x384xf32, #tpu.memory_space<vmem>>, vector<1x384xf32>
    %16 = vector.broadcast %15 : vector<1x384xf32> to vector<128x384xf32>
    %17 = arith.addf %14, %16 : vector<128x384xf32>
    %cst_14 = arith.constant 0.000000e+00 : f32
    %18 = vector.broadcast %cst_14 : f32 to vector<128x384xf32>
    %19 = arith.maximumf %17, %18 : vector<128x384xf32>
    %20 = tpu.transpose %19, [1, 0] : vector<128x384xf32> -> vector<384x128xf32>
    %21 = arith.truncf %20 : vector<384x128xf32> to vector<384x128xbf16>
    %c0_15 = arith.constant 0 : index
    %c0_16 = arith.constant 0 : index
    %22 = vector.load %arg7[%c0_15, %c0_16] : memref<8x384xbf16, #tpu.memory_space<vmem>>, vector<8x384xbf16>
    %cst_17 = arith.constant dense<0.000000e+00> : vector<8x128xf32>
    %23 = tpu.matmul %22, %21, %cst_17 {dimension_numbers = #tpu.dot_dimension_numbers<[1], [0], [0], [1], [0, 0, 1, 1], [], []>} : vector<8x384xbf16>, vector<384x128xbf16>, vector<8x128xf32> -> vector<8x128xf32>
    %c0_18 = arith.constant 0 : index
    %24 = memref.load %arg8[%c0_18] : memref<1xf32, #tpu.memory_space<smem>>
    %25 = vector.broadcast %24 : f32 to vector<8x128xf32>
    %26 = arith.addf %23, %25 : vector<8x128xf32>
    %c0_19 = arith.constant 0 : index
    %c0_20 = arith.constant 0 : index
    %27 = vector.load %arg9[%c0_19, %c0_20] : memref<8x128xf32, #tpu.memory_space<vmem>>, vector<8x128xf32>
    tpu.vector_store %arg9[%c0_19, %c0_20], %26 {strides = array<i32>} : memref<8x128xf32, #tpu.memory_space<vmem>>, vector<8x128xf32>,
    return
  }
  func.func @transform_0(%arg0: i32) -> (i32, i32) {
    %c0_i32 = arith.constant 0 : i32
    %c0_i32_0 = arith.constant 0 : i32
    return %arg0, %c0_i32 : i32, i32
  }
  func.func @transform_1(%arg0: i32) -> (i32, i32) {
    %c0_i32 = arith.constant 0 : i32
    %c0_i32_0 = arith.constant 0 : i32
    %c0_i32_1 = arith.constant 0 : i32
    return %c0_i32, %c0_i32_0 : i32, i32
  }
  func.func @transform_2(%arg0: i32) -> (i32, i32) {
    %c0_i32 = arith.constant 0 : i32
    %c0_i32_0 = arith.constant 0 : i32
    %c0_i32_1 = arith.constant 0 : i32
    return %c0_i32, %c0_i32_0 : i32, i32
  }
  func.func @transform_3(%arg0: i32) -> (i32, i32) {
    %c0_i32 = arith.constant 0 : i32
    %c0_i32_0 = arith.constant 0 : i32
    %c0_i32_1 = arith.constant 0 : i32
    return %c0_i32, %c0_i32_0 : i32, i32
  }
  func.func @transform_4(%arg0: i32) -> (i32, i32) {
    %c0_i32 = arith.constant 0 : i32
    %c0_i32_0 = arith.constant 0 : i32
    %c0_i32_1 = arith.constant 0 : i32
    return %c0_i32, %c0_i32_0 : i32, i32
  }
  func.func @transform_5(%arg0: i32) -> (i32, i32) {
    %c0_i32 = arith.constant 0 : i32
    %c0_i32_0 = arith.constant 0 : i32
    %c0_i32_1 = arith.constant 0 : i32
    return %c0_i32, %c0_i32_0 : i32, i32
  }
  func.func @transform_6(%arg0: i32) -> (i32, i32) {
    %c0_i32 = arith.constant 0 : i32
    %c0_i32_0 = arith.constant 0 : i32
    %c0_i32_1 = arith.constant 0 : i32
    return %c0_i32, %c0_i32_0 : i32, i32
  }
  func.func @transform_7(%arg0: i32) -> i32 {
    %c0_i32 = arith.constant 0 : i32
    %c0_i32_0 = arith.constant 0 : i32
    return %c0_i32 : i32
  }
  func.func @transform_8(%arg0: i32) -> (i32, i32) {
    %c0_i32 = arith.constant 0 : i32
    %c0_i32_0 = arith.constant 0 : i32
    return %c0_i32, %arg0 : i32, i32
  }
}

</mosaic_0001>

<llo_original>
// kernel: tpu_custom_call.1
$region0: #{tpu_custom_call.1}
  #allocation0 [shape = 'u32[]', space=smem, size = 0x4, offset = 0x4, fixed_abs, tag = 'smem constant byte address 0x4 - core index']
  #allocation1 [shape = 'u32[144,128]{1,0:T(1,128)}', space=vmem, size = 0x12000, scoped, tag = 'internal scratch']
  #allocation2 [shape = 'f32[1]{0:T(128)S(6)}', space=smem, size = 0x200, scoped, tag = 'scoped memory for tpu_custom_call.1']
  %s0 = inlined_call_operand.hbm [shape: f32[128,128], index: 0, kind: input, shape index: {}]
  %s1 = inlined_call_operand.hbm [shape: bf16[128,512], index: 1, kind: input, shape index: {}]
  %s2 = inlined_call_operand.hbm [shape: f32[1,512], index: 2, kind: input, shape index: {}]
  %s3 = inlined_call_operand.hbm [shape: bf16[512,384], index: 3, kind: input, shape index: {}]
  %s4 = inlined_call_operand.hbm [shape: bf16[128,384], index: 4, kind: input, shape index: {}]
  %s5 = inlined_call_operand.hbm [shape: f32[1,384], index: 5, kind: input, shape index: {}]
  %s6 = inlined_call_operand.vmem [shape: bf16[8,384], index: 6, kind: input, shape index: {}]
  %s7 = inlined_call_operand.<no memory space> [shape: f32[1], index: 7, kind: input, shape index: {}]
  %s8 = inlined_call_operand.hbm [shape: f32[8,128], index: 8, kind: output, shape index: {}]
  %s9 = sld [smem:[#allocation0]]
  $region66: #{tpu_custom_call.1} parent=0
    _
  %s11 = ssub.s32 1, %s9
  %s12 = scalar_select 0, %s11, %s9
  %13 = sst [smem:[#allocation2]] %s7
  $region1: #{tpu_custom_call.1} parent=0
    #allocation3 [shape = 'u8[65536]{0}', space=vmem, size = 0x10000, scoped, tag = 'input window, operand 0, single buffered']
    #allocation4 [shape = 's32[1]{0}', space=sflag, size = 0x4, scoped, tag = 'scoped memory for tpu_custom_call.1']
    #allocation5 [shape = 's32[1]{0}', space=sflag, size = 0x4, scoped, tag = 'scoped memory for tpu_custom_call.1']
    #allocation6 [shape = 'u8[131072]{0}', space=vmem, size = 0x20000, scoped, tag = 'input window, operand 1, single buffered']
    #allocation7 [shape = 's32[1]{0}', space=sflag, size = 0x4, scoped, tag = 'scoped memory for tpu_custom_call.1']
    #allocation8 [shape = 'u8[2048]{0}', space=vmem, size = 0x800, scoped, tag = 'input window, operand 2, single buffered']
    #allocation9 [shape = 'u8[393216]{0}', space=vmem, size = 0x60000, scoped, tag = 'input window, operand 3, single buffered']
    #allocation10 [shape = 's32[1]{0}', space=sflag, size = 0x4, scoped, tag = 'scoped memory for tpu_custom_call.1']
    #allocation11 [shape = 'u8[98304]{0}', space=vmem, size = 0x18000, scoped, tag = 'input window, operand 4, single buffered']
    #allocation12 [shape = 'u8[1536]{0}', space=vmem, size = 0x800, scoped, tag = 'input window, operand 5, single buffered']
    #allocation13 [shape = 's32[1]{0}', space=sflag, size = 0x4, scoped, tag = 'scoped memory for tpu_custom_call.1']
    #allocation14 [shape = 'u8[4096]{0}', space=vmem, size = 0x1000, scoped, tag = 'output window, operand 0, single buffered']
    %14 = vsyncpa [#allocation4], 0
    %15 = vsyncpa [#allocation7], 0
    %16 = vsyncpa [#allocation10], 0
    %17 = vsyncpa [#allocation13], 0
    %18 = vsyncpa [#allocation5], 0
    // Predicated region
    $region2: #{tpu_custom_call.1} parent=1 // pred_check
      _
    $region3: #{tpu_custom_call.1} parent=1 // pred_check_branch
      %20 = sbr.rel (0) target = $region5
    $region4: #{tpu_custom_call.1} parent=1 // pred_region
      %s22 = ssub.s32 2048, 2048
      %23 = vsyncadd [#allocation4], %s22
      %s24 = sshll.u32 [#allocation3], 4
      %s25 = int_to_ptr.vmem [resolvable:$true] %s24
      %30 = dma.hbm_to_vmem [thread:$0]  %s0, 2048, %s25, [#allocation4], 128, 128, 8
    $region5: #{tpu_custom_call.1} parent=1 // pred_fallthru
      _
    // Predicated region
    $region6: #{tpu_custom_call.1} parent=1 // pred_check
      _
    $region7: #{tpu_custom_call.1} parent=1 // pred_check_branch
      %32 = sbr.rel (0) target = $region9
    $region8: #{tpu_custom_call.1} parent=1 // pred_region
      %s34 = ssub.s32 4096, 4096
      %35 = vsyncadd [#allocation7], %s34
      %s36 = sshll.u32 [#allocation6], 4
      %s37 = int_to_ptr.vmem [resolvable:$true] %s36
      %42 = dma.hbm_to_vmem [thread:$0]  %s1, 4096, %s37, [#allocation7], 256, 256, 16
    $region9: #{tpu_custom_call.1} parent=1 // pred_fallthru
      _
    // Predicated region
    $region10: #{tpu_custom_call.1} parent=1 // pred_check
      _
    $region11: #{tpu_custom_call.1} parent=1 // pred_check_branch
      %44 = sbr.rel (0) target = $region13
    $region12: #{tpu_custom_call.1} parent=1 // pred_region
      %s46 = ssub.s32 64, 64
      %47 = vsyncadd [#allocation7], %s46
      %s49 = sshll.u32 [#allocation8], 4
      %s50 = int_to_ptr.vmem [resolvable:$true] %s49
      %52 = dma.hbm_to_vmem [thread:$0]  %s2, 64, %s50, [#allocation7]
    $region13: #{tpu_custom_call.1} parent=1 // pred_fallthru
      _
    // Predicated region
    $region14: #{tpu_custom_call.1} parent=1 // pred_check
      _
    $region15: #{tpu_custom_call.1} parent=1 // pred_check_branch
      %54 = sbr.rel (0) target = $region17
    $region16: #{tpu_custom_call.1} parent=1 // pred_region
      %s56 = ssub.s32 12288, 12288
      %57 = vsyncadd [#allocation10], %s56
      %s58 = sshll.u32 [#allocation9], 4
      %s59 = int_to_ptr.vmem [resolvable:$true] %s58
      %64 = dma.hbm_to_vmem [thread:$0]  %s3, 12288, %s59, [#allocation10], 192, 192, 12
    $region17: #{tpu_custom_call.1} parent=1 // pred_fallthru
      _
    // Predicated region
    $region18: #{tpu_custom_call.1} parent=1 // pred_check
      _
    $region19: #{tpu_custom_call.1} parent=1 // pred_check_branch
      %66 = sbr.rel (0) target = $region21
    $region20: #{tpu_custom_call.1} parent=1 // pred_region
      %s68 = ssub.s32 3072, 3072
      %69 = vsyncadd [#allocation10], %s68
      %s70 = sshll.u32 [#allocation11], 4
      %s71 = int_to_ptr.vmem [resolvable:$true] %s70
      %76 = dma.hbm_to_vmem [thread:$0]  %s4, 3072, %s71, [#allocation10], 192, 192, 12
    $region21: #{tpu_custom_call.1} parent=1 // pred_fallthru
      _
    // Predicated region
    $region22: #{tpu_custom_call.1} parent=1 // pred_check
      _
    $region23: #{tpu_custom_call.1} parent=1 // pred_check_branch
      %78 = sbr.rel (0) target = $region25
    $region24: #{tpu_custom_call.1} parent=1 // pred_region
      %s80 = ssub.s32 48, 48
      %81 = vsyncadd [#allocation13], %s80
      %s83 = sshll.u32 [#allocation12], 4
      %s84 = int_to_ptr.vmem [resolvable:$true] %s83
      %86 = dma.hbm_to_vmem [thread:$0]  %s5, 48, %s84, [#allocation13]
    $region25: #{tpu_custom_call.1} parent=1 // pred_fallthru
      _
    // Predicated region
    $region26: #{tpu_custom_call.1} parent=1 // pred_check
      _
    $region27: #{tpu_custom_call.1} parent=1 // pred_check_branch
      %88 = sbr.rel (0) target = $region29
    $region28: #{tpu_custom_call.1} parent=1 // pred_region
      _
    $region29: #{tpu_custom_call.1} parent=1 // pred_fallthru
      _
    // Predicated region
    $region30: #{tpu_custom_call.1} parent=1 // pred_check
      _
    $region31: #{tpu_custom_call.1} parent=1 // pred_check_branch
      %90 = sbr.rel (0) target = $region33
    $region32: #{tpu_custom_call.1} parent=1 // pred_region
      _
    $region33: #{tpu_custom_call.1} parent=1 // pred_fallthru
      _
    // Predicated region
    $region34: #{tpu_custom_call.1} parent=1 // pred_check
      _
    $region35: #{tpu_custom_call.1} parent=1 // pred_check_branch
      %92 = sbr.rel (0) target = $region37
    $region36: #{tpu_custom_call.1} parent=1 // pred_region
      %93 = dma.done [#allocation4], 2048
    $region37: #{tpu_custom_call.1} parent=1 // pred_fallthru
      _
    // Predicated region
    $region38: #{tpu_custom_call.1} parent=1 // pred_check
      _
    $region39: #{tpu_custom_call.1} parent=1 // pred_check_branch
      %95 = sbr.rel (0) target = $region41
    $region40: #{tpu_custom_call.1} parent=1 // pred_region
      %96 = dma.done [#allocation7], 4096
    $region41: #{tpu_custom_call.1} parent=1 // pred_fallthru
      _
    // Predicated region
    $region42: #{tpu_custom_call.1} parent=1 // pred_check
      _
    $region43: #{tpu_custom_call.1} parent=1 // pred_check_branch
      %98 = sbr.rel (0) target = $region45
    $region44: #{tpu_custom_call.1} parent=1 // pred_region
      %99 = dma.done [#allocation7], 64
    $region45: #{tpu_custom_call.1} parent=1 // pred_fallthru
      _
    // Predicated region
    $region46: #{tpu_custom_call.1} parent=1 // pred_check
      _
    $region47: #{tpu_custom_call.1} parent=1 // pred_check_branch
      %101 = sbr.rel (0) target = $region49
    $region48: #{tpu_custom_call.1} parent=1 // pred_region
      %102 = dma.done [#allocation10], 12288
    $region49: #{tpu_custom_call.1} parent=1 // pred_fallthru
      _
    // Predicated region
    $region50: #{tpu_custom_call.1} parent=1 // pred_check
      _
    $region51: #{tpu_custom_call.1} parent=1 // pred_check_branch
      %104 = sbr.rel (0) target = $region53
    $region52: #{tpu_custom_call.1} parent=1 // pred_region
      %105 = dma.done [#allocation10], 3072
    $region53: #{tpu_custom_call.1} parent=1 // pred_fallthru
      _
    // Predicated region
    $region54: #{tpu_custom_call.1} parent=1 // pred_check
      _
    $region55: #{tpu_custom_call.1} parent=1 // pred_check_branch
      %107 = sbr.rel (0) target = $region57
    $region56: #{tpu_custom_call.1} parent=1 // pred_region
      %108 = dma.done [#allocation13], 48
    $region57: #{tpu_custom_call.1} parent=1 // pred_fallthru
      _
    %v110 = vld [vmem:[#allocation3] sm:$0xff]
    %v111 = vld [vmem:[#allocation3 + $0x8] sm:$0xff]
    %v112 = vld [vmem:[#allocation3 + $0x10] sm:$0xff]
    %v113 = vld [vmem:[#allocation3 + $0x18] sm:$0xff]
    %v114 = vld [vmem:[#allocation3 + $0x20] sm:$0xff]
    %v115 = vld [vmem:[#allocation3 + $0x28] sm:$0xff]
    %v116 = vld [vmem:[#allocation3 + $0x30] sm:$0xff]
    %v117 = vld [vmem:[#allocation3 + $0x38] sm:$0xff]
    %v118 = vld [vmem:[#allocation3 + $0x40] sm:$0xff]
    %v119 = vld [vmem:[#allocation3 + $0x48] sm:$0xff]
    %v120 = vld [vmem:[#allocation3 + $0x50] sm:$0xff]
    %v121 = vld [vmem:[#allocation3 + $0x58] sm:$0xff]
    %v122 = vld [vmem:[#allocation3 + $0x60] sm:$0xff]
    %v123 = vld [vmem:[#allocation3 + $0x68] sm:$0xff]
    %v124 = vld [vmem:[#allocation3 + $0x70] sm:$0xff]
    %v125 = vld [vmem:[#allocation3 + $0x78] sm:$0xff]
    %v126 = vpack.c.bf16 %v111, %v110
    %v127 = vpack.c.bf16 %v113, %v112
    %v128 = vpack.c.bf16 %v115, %v114
    %v129 = vpack.c.bf16 %v117, %v116
    %v130 = vpack.c.bf16 %v119, %v118
    %v131 = vpack.c.bf16 %v121, %v120
    %v132 = vpack.c.bf16 %v123, %v122
    %v133 = vpack.c.bf16 %v125, %v124
    %v134 = vld [vmem:[#allocation6] sm:$0xff]
    %v135 = vld [vmem:[#allocation6 + $0x8] sm:$0xff]
    %v136 = vld [vmem:[#allocation6 + $0x10] sm:$0xff]
    %v137 = vld [vmem:[#allocation6 + $0x18] sm:$0xff]
    %v138 = vld [vmem:[#allocation6 + $0x20] sm:$0xff]
    %v139 = vld [vmem:[#allocation6 + $0x28] sm:$0xff]
    %v140 = vld [vmem:[#allocation6 + $0x30] sm:$0xff]
    %v141 = vld [vmem:[#allocation6 + $0x38] sm:$0xff]
    %v142 = vld [vmem:[#allocation6 + $0x40] sm:$0xff]
    %v143 = vld [vmem:[#allocation6 + $0x48] sm:$0xff]
    %v144 = vld [vmem:[#allocation6 + $0x50] sm:$0xff]
    %v145 = vld [vmem:[#allocation6 + $0x58] sm:$0xff]
    %v146 = vld [vmem:[#allocation6 + $0x60] sm:$0xff]
    %v147 = vld [vmem:[#allocation6 + $0x68] sm:$0xff]
    %v148 = vld [vmem:[#allocation6 + $0x70] sm:$0xff]
    %v149 = vld [vmem:[#allocation6 + $0x78] sm:$0xff]
    %v150 = vld [vmem:[#allocation6 + $0x80] sm:$0xff]
    %v151 = vld [vmem:[#allocation6 + $0x88] sm:$0xff]
    %v152 = vld [vmem:[#allocation6 + $0x90] sm:$0xff]
    %v153 = vld [vmem:[#allocation6 + $0x98] sm:$0xff]
    %v154 = vld [vmem:[#allocation6 + $0xa0] sm:$0xff]
    %v155 = vld [vmem:[#allocation6 + $0xa8] sm:$0xff]
    %v156 = vld [vmem:[#allocation6 + $0xb0] sm:$0xff]
    %v157 = vld [vmem:[#allocation6 + $0xb8] sm:$0xff]
    %v158 = vld [vmem:[#allocation6 + $0xc0] sm:$0xff]
    %v159 = vld [vmem:[#allocation6 + $0xc8] sm:$0xff]
    %v160 = vld [vmem:[#allocation6 + $0xd0] sm:$0xff]
    %v161 = vld [vmem:[#allocation6 + $0xd8] sm:$0xff]
    %v162 = vld [vmem:[#allocation6 + $0xe0] sm:$0xff]
    %v163 = vld [vmem:[#allocation6 + $0xe8] sm:$0xff]
    %v164 = vld [vmem:[#allocation6 + $0xf0] sm:$0xff]
    %v165 = vld [vmem:[#allocation6 + $0xf8] sm:$0xff]
    %v166 = vld [vmem:[#allocation8] sm:$0xf]
    %v168 = vlaneseq
    %v169 = vshrl.u32 %v168, 7
    %v170 = vsub.s32 0, %v169
    %v171 = vrot.slane %v166, %v170
    %v172 = vlaneseq
    %v173 = vshrl.u32 %v172, 7
    %v174 = vsub.s32 1, %v173
    %v175 = vrot.slane %v166, %v174
    %v176 = vlaneseq
    %v177 = vshrl.u32 %v176, 7
    %v178 = vsub.s32 2, %v177
    %v179 = vrot.slane %v166, %v178
    %v180 = vlaneseq
    %v181 = vshrl.u32 %v180, 7
    %v182 = vsub.s32 3, %v181
    %v183 = vrot.slane %v166, %v182
    %v220 = vunpack.c.l.b16 %v134
    %v221 = vunpack.c.h.b16 %v134
    %v222 = vunpack.c.l.b16 %v135
    %v223 = vunpack.c.h.b16 %v135
    %v224 = vunpack.c.l.b16 %v136
    %v225 = vunpack.c.h.b16 %v136
    %v226 = vunpack.c.l.b16 %v137
    %v227 = vunpack.c.h.b16 %v137
    %v228 = vunpack.c.l.b16 %v138
    %v229 = vunpack.c.h.b16 %v138
    %v230 = vunpack.c.l.b16 %v139
    %v231 = vunpack.c.h.b16 %v139
    %v232 = vunpack.c.l.b16 %v140
    %v233 = vunpack.c.h.b16 %v140
    %v234 = vunpack.c.l.b16 %v141
    %v235 = vunpack.c.h.b16 %v141
    %v236 = vunpack.c.l.b16 %v142
    %v237 = vunpack.c.h.b16 %v142
    %v238 = vunpack.c.l.b16 %v143
    %v239 = vunpack.c.h.b16 %v143
    %v240 = vunpack.c.l.b16 %v144
    %v241 = vunpack.c.h.b16 %v144
    %v242 = vunpack.c.l.b16 %v145
    %v243 = vunpack.c.h.b16 %v145
    %v244 = vunpack.c.l.b16 %v146
    %v245 = vunpack.c.h.b16 %v146
    %v246 = vunpack.c.l.b16 %v147
    %v247 = vunpack.c.h.b16 %v147
    %v248 = vunpack.c.l.b16 %v148
    %v249 = vunpack.c.h.b16 %v148
    %v250 = vunpack.c.l.b16 %v149
    %v251 = vunpack.c.h.b16 %v149
    %v252 = vunpack.c.l.b16 %v150
    %v253 = vunpack.c.h.b16 %v150
    %v254 = vunpack.c.l.b16 %v151
    %v255 = vunpack.c.h.b16 %v151
    %v256 = vunpack.c.l.b16 %v152
    %v257 = vunpack.c.h.b16 %v152
    %v258 = vunpack.c.l.b16 %v153
    %v259 = vunpack.c.h.b16 %v153
    %v260 = vunpack.c.l.b16 %v154
    %v261 = vunpack.c.h.b16 %v154
    %v262 = vunpack.c.l.b16 %v155
    %v263 = vunpack.c.h.b16 %v155
    %v264 = vunpack.c.l.b16 %v156
    %v265 = vunpack.c.h.b16 %v156
    %v266 = vunpack.c.l.b16 %v157
    %v267 = vunpack.c.h.b16 %v157
    %v268 = vunpack.c.l.b16 %v158
    %v269 = vunpack.c.h.b16 %v158
    %v270 = vunpack.c.l.b16 %v159
    %v271 = vunpack.c.h.b16 %v159
    %v272 = vunpack.c.l.b16 %v160
    %v273 = vunpack.c.h.b16 %v160
    %v274 = vunpack.c.l.b16 %v161
    %v275 = vunpack.c.h.b16 %v161
    %v276 = vunpack.c.l.b16 %v162
    %v277 = vunpack.c.h.b16 %v162
    %v278 = vunpack.c.l.b16 %v163
    %v279 = vunpack.c.h.b16 %v163
    %v280 = vunpack.c.l.b16 %v164
    %v281 = vunpack.c.h.b16 %v164
    %v282 = vunpack.c.l.b16 %v165
    %v283 = vunpack.c.h.b16 %v165
    %v284 = vpack.c.b16 %v224, %v220
    %v285 = vpack.c.b16 %v225, %v221
    %v286 = vpack.c.b16 %v226, %v222
    %v287 = vpack.c.b16 %v227, %v223
    %v288 = vpack.c.b16 %v232, %v228
    %v289 = vpack.c.b16 %v233, %v229
    %v290 = vpack.c.b16 %v234, %v230
    %v291 = vpack.c.b16 %v235, %v231
    %v292 = vpack.c.b16 %v240, %v236
    %v293 = vpack.c.b16 %v241, %v237
    %v294 = vpack.c.b16 %v242, %v238
    %v295 = vpack.c.b16 %v243, %v239
    %v296 = vpack.c.b16 %v248, %v244
    %v297 = vpack.c.b16 %v249, %v245
    %v298 = vpack.c.b16 %v250, %v246
    %v299 = vpack.c.b16 %v251, %v247
    %v300 = vpack.c.b16 %v256, %v252
    %v301 = vpack.c.b16 %v257, %v253
    %v302 = vpack.c.b16 %v258, %v254
    %v303 = vpack.c.b16 %v259, %v255
    %v304 = vpack.c.b16 %v264, %v260
    %v305 = vpack.c.b16 %v265, %v261
    %v306 = vpack.c.b16 %v266, %v262
    %v307 = vpack.c.b16 %v267, %v263
    %v308 = vpack.c.b16 %v272, %v268
    %v309 = vpack.c.b16 %v273, %v269
    %v310 = vpack.c.b16 %v274, %v270
    %v311 = vpack.c.b16 %v275, %v271
    %v312 = vpack.c.b16 %v280, %v276
    %v313 = vpack.c.b16 %v281, %v277
    %v314 = vpack.c.b16 %v282, %v278
    %v315 = vpack.c.b16 %v283, %v279
    %348 = vmatprep.subr.bf16.mxu0 %v313
    %349 = vmatpush1.bf16.msra.mxu0 %v312
    %350 = vmatprep.subr.bf16.mxu0 %v309
    %351 = vmatpush1.bf16.msra.mxu0 %v308
    %352 = vmatprep.subr.bf16.mxu0 %v305
    %353 = vmatpush1.bf16.msra.mxu0 %v304
    %354 = vmatprep.subr.bf16.mxu0 %v301
    %355 = vmatpush1.bf16.msra.mxu0 %v300
    %356 = vmatprep.subr.bf16.mxu0 %v297
    %357 = vmatpush1.bf16.msra.mxu0 %v296
    %358 = vmatprep.subr.bf16.mxu0 %v293
    %359 = vmatpush1.bf16.msra.mxu0 %v292
    %360 = vmatprep.subr.bf16.mxu0 %v289
    %361 = vmatpush1.bf16.msra.mxu0 %v288
    %362 = vmatprep.subr.bf16.mxu0 %v285
    %363 = vmatpush1.bf16.msra.mxu0 %v284
    %364 = vmatprep.subr.bf16.mxu0 0
    %365 = vmatpush2.bf16.msra.mxu0 0
    %366 = vmatprep.subr.bf16.mxu0 0
    %367 = vmatpush2.bf16.msra.mxu0 0
    %368 = vmatprep.subr.bf16.mxu0 0
    %369 = vmatpush2.bf16.msra.mxu0 0
    %370 = vmatprep.subr.bf16.mxu0 0
    %371 = vmatpush2.bf16.msra.mxu0 0
    %372 = vmatprep.subr.bf16.mxu0 0
    %373 = vmatpush2.bf16.msra.mxu0 0
    %374 = vmatprep.subr.bf16.mxu0 0
    %375 = vmatpush2.bf16.msra.mxu0 0
    %376 = vmatprep.subr.bf16.mxu0 0
    %377 = vmatpush2.bf16.msra.mxu0 0
    %378 = vmatprep.subr.bf16.mxu0 0
    %379 = vmatpush2.bf16.msra.mxu0 0
    %380 = vmatprep.mubr.bf16.mxu0 0
    %381 = vmatmul.mubr.bf16.gmra.mxu0 %v126
    %v382 = vpop.f32.mrf.mxu0
    %v383 = vadd.f32 %v171, %v382
    %v384 = vpop.f32.mrf.mxu0
    %v385 = vadd.f32 %v175, %v384
    %v386 = vpop.f32.mrf.mxu0
    %v387 = vadd.f32 %v171, %v386
    %v388 = vpop.f32.mrf.mxu0
    %v389 = vadd.f32 %v175, %v388
    %390 = vmatprep.mubr.bf16.mxu0 0
    %391 = vmatmul.mubr.bf16.gmra.mxu0 %v127
    %v392 = vpop.f32.mrf.mxu0
    %v393 = vadd.f32 %v171, %v392
    %v394 = vpop.f32.mrf.mxu0
    %v395 = vadd.f32 %v175, %v394
    %v396 = vpop.f32.mrf.mxu0
    %v397 = vadd.f32 %v171, %v396
    %v398 = vpop.f32.mrf.mxu0
    %v399 = vadd.f32 %v175, %v398
    %400 = vmatprep.mubr.bf16.mxu0 0
    %401 = vmatmul.mubr.bf16.gmra.mxu0 %v128
    %v402 = vpop.f32.mrf.mxu0
    %v403 = vadd.f32 %v171, %v402
    %v404 = vpop.f32.mrf.mxu0
    %v405 = vadd.f32 %v175, %v404
    %v406 = vpop.f32.mrf.mxu0
    %v407 = vadd.f32 %v171, %v406
    %v408 = vpop.f32.mrf.mxu0
    %v409 = vadd.f32 %v175, %v408
    %410 = vmatprep.mubr.bf16.mxu0 0
    %411 = vmatmul.mubr.bf16.gmra.mxu0 %v129
    %v412 = vpop.f32.mrf.mxu0
    %v413 = vadd.f32 %v171, %v412
    %v414 = vpop.f32.mrf.mxu0
    %v415 = vadd.f32 %v175, %v414
    %v416 = vpop.f32.mrf.mxu0
    %v417 = vadd.f32 %v171, %v416
    %v418 = vpop.f32.mrf.mxu0
    %v419 = vadd.f32 %v175, %v418
    %420 = vmatprep.mubr.bf16.mxu0 0
    %421 = vmatmul.mubr.bf16.gmra.mxu0 %v130
    %v422 = vpop.f32.mrf.mxu0
    %v423 = vadd.f32 %v171, %v422
    %v424 = vpop.f32.mrf.mxu0
    %v425 = vadd.f32 %v175, %v424
    %v426 = vpop.f32.mrf.mxu0
    %v427 = vadd.f32 %v171, %v426
    %v428 = vpop.f32.mrf.mxu0
    %v429 = vadd.f32 %v175, %v428
    %430 = vmatprep.mubr.bf16.mxu0 0
    %431 = vmatmul.mubr.bf16.gmra.mxu0 %v131
    %v432 = vpop.f32.mrf.mxu0
    %v433 = vadd.f32 %v171, %v432
    %v434 = vpop.f32.mrf.mxu0
    %v435 = vadd.f32 %v175, %v434
    %v436 = vpop.f32.mrf.mxu0
    %v437 = vadd.f32 %v171, %v436
    %v438 = vpop.f32.mrf.mxu0
    %v439 = vadd.f32 %v175, %v438
    %440 = vmatprep.mubr.bf16.mxu0 0
    %441 = vmatmul.mubr.bf16.gmra.mxu0 %v132
    %v442 = vpop.f32.mrf.mxu0
    %v443 = vadd.f32 %v171, %v442
    %v444 = vpop.f32.mrf.mxu0
    %v445 = vadd.f32 %v175, %v444
    %v446 = vpop.f32.mrf.mxu0
    %v447 = vadd.f32 %v171, %v446
    %v448 = vpop.f32.mrf.mxu0
    %v449 = vadd.f32 %v175, %v448
    %450 = vmatprep.mubr.bf16.mxu0 0
    %451 = vmatmul.mubr.bf16.gmra.mxu0 %v133
    %v452 = vpop.f32.mrf.mxu0
    %v453 = vadd.f32 %v171, %v452
    %v454 = vpop.f32.mrf.mxu0
    %v455 = vadd.f32 %v175, %v454
    %v456 = vpop.f32.mrf.mxu0
    %v457 = vadd.f32 %v171, %v456
    %v458 = vpop.f32.mrf.mxu0
    %v459 = vadd.f32 %v175, %v458
    %460 = vdwg.mxu0
    %461 = vmatprep.subr.bf16.mxu0 %v315
    %462 = vmatpush1.bf16.msra.mxu0 %v314
    %463 = vmatprep.subr.bf16.mxu0 %v311
    %464 = vmatpush1.bf16.msra.mxu0 %v310
    %465 = vmatprep.subr.bf16.mxu0 %v307
    %466 = vmatpush1.bf16.msra.mxu0 %v306
    %467 = vmatprep.subr.bf16.mxu0 %v303
    %468 = vmatpush1.bf16.msra.mxu0 %v302
    %469 = vmatprep.subr.bf16.mxu0 %v299
    %470 = vmatpush1.bf16.msra.mxu0 %v298
    %471 = vmatprep.subr.bf16.mxu0 %v295
    %472 = vmatpush1.bf16.msra.mxu0 %v294
    %473 = vmatprep.subr.bf16.mxu0 %v291
    %474 = vmatpush1.bf16.msra.mxu0 %v290
    %475 = vmatprep.subr.bf16.mxu0 %v287
    %476 = vmatpush1.bf16.msra.mxu0 %v286
    %477 = vmatprep.subr.bf16.mxu0 0
    %478 = vmatpush2.bf16.msra.mxu0 0
    %479 = vmatprep.subr.bf16.mxu0 0
    %480 = vmatpush2.bf16.msra.mxu0 0
    %481 = vmatprep.subr.bf16.mxu0 0
    %482 = vmatpush2.bf16.msra.mxu0 0
    %483 = vmatprep.subr.bf16.mxu0 0
    %484 = vmatpush2.bf16.msra.mxu0 0
    %485 = vmatprep.subr.bf16.mxu0 0
    %486 = vmatpush2.bf16.msra.mxu0 0
    %487 = vmatprep.subr.bf16.mxu0 0
    %488 = vmatpush2.bf16.msra.mxu0 0
    %489 = vmatprep.subr.bf16.mxu0 0
    %490 = vmatpush2.bf16.msra.mxu0 0
    %491 = vmatprep.subr.bf16.mxu0 0
    %492 = vmatpush2.bf16.msra.mxu0 0
    %493 = vmatprep.mubr.bf16.mxu0 0
    %494 = vmatmul.mubr.bf16.gmra.mxu0 %v126
    %v495 = vpop.f32.mrf.mxu0
    %v496 = vadd.f32 %v179, %v495
    %v497 = vpop.f32.mrf.mxu0
    %v498 = vadd.f32 %v183, %v497
    %v499 = vpop.f32.mrf.mxu0
    %v500 = vadd.f32 %v179, %v499
    %v501 = vpop.f32.mrf.mxu0
    %v502 = vadd.f32 %v183, %v501
    %503 = vmatprep.mubr.bf16.mxu0 0
    %504 = vmatmul.mubr.bf16.gmra.mxu0 %v127
    %v505 = vpop.f32.mrf.mxu0
    %v506 = vadd.f32 %v179, %v505
    %v507 = vpop.f32.mrf.mxu0
    %v508 = vadd.f32 %v183, %v507
    %v509 = vpop.f32.mrf.mxu0
    %v510 = vadd.f32 %v179, %v509
    %v511 = vpop.f32.mrf.mxu0
    %v512 = vadd.f32 %v183, %v511
    %513 = vmatprep.mubr.bf16.mxu0 0
    %514 = vmatmul.mubr.bf16.gmra.mxu0 %v128
    %v515 = vpop.f32.mrf.mxu0
    %v516 = vadd.f32 %v179, %v515
    %v517 = vpop.f32.mrf.mxu0
    %v518 = vadd.f32 %v183, %v517
    %v519 = vpop.f32.mrf.mxu0
    %v520 = vadd.f32 %v179, %v519
    %v521 = vpop.f32.mrf.mxu0
    %v522 = vadd.f32 %v183, %v521
    %523 = vmatprep.mubr.bf16.mxu0 0
    %524 = vmatmul.mubr.bf16.gmra.mxu0 %v129
    %v525 = vpop.f32.mrf.mxu0
    %v526 = vadd.f32 %v179, %v525
    %v527 = vpop.f32.mrf.mxu0
    %v528 = vadd.f32 %v183, %v527
    %v529 = vpop.f32.mrf.mxu0
    %v530 = vadd.f32 %v179, %v529
    %v531 = vpop.f32.mrf.mxu0
    %v532 = vadd.f32 %v183, %v531
    %533 = vmatprep.mubr.bf16.mxu0 0
    %534 = vmatmul.mubr.bf16.gmra.mxu0 %v130
    %v535 = vpop.f32.mrf.mxu0
    %v536 = vadd.f32 %v179, %v535
    %v537 = vpop.f32.mrf.mxu0
    %v538 = vadd.f32 %v183, %v537
    %v539 = vpop.f32.mrf.mxu0
    %v540 = vadd.f32 %v179, %v539
    %v541 = vpop.f32.mrf.mxu0
    %v542 = vadd.f32 %v183, %v541
    %543 = vmatprep.mubr.bf16.mxu0 0
    %544 = vmatmul.mubr.bf16.gmra.mxu0 %v131
    %v545 = vpop.f32.mrf.mxu0
    %v546 = vadd.f32 %v179, %v545
    %v547 = vpop.f32.mrf.mxu0
    %v548 = vadd.f32 %v183, %v547
    %v549 = vpop.f32.mrf.mxu0
    %v550 = vadd.f32 %v179, %v549
    %v551 = vpop.f32.mrf.mxu0
    %v552 = vadd.f32 %v183, %v551
    %553 = vmatprep.mubr.bf16.mxu0 0
    %554 = vmatmul.mubr.bf16.gmra.mxu0 %v132
    %v555 = vpop.f32.mrf.mxu0
    %v556 = vadd.f32 %v179, %v555
    %v557 = vpop.f32.mrf.mxu0
    %v558 = vadd.f32 %v183, %v557
    %v559 = vpop.f32.mrf.mxu0
    %v560 = vadd.f32 %v179, %v559
    %v561 = vpop.f32.mrf.mxu0
    %v562 = vadd.f32 %v183, %v561
    %563 = vmatprep.mubr.bf16.mxu0 0
    %564 = vmatmul.mubr.bf16.gmra.mxu0 %v133
    %v565 = vpop.f32.mrf.mxu0
    %v566 = vadd.f32 %v179, %v565
    %v567 = vpop.f32.mrf.mxu0
    %v568 = vadd.f32 %v183, %v567
    %v569 = vpop.f32.mrf.mxu0
    %v570 = vadd.f32 %v179, %v569
    %v571 = vpop.f32.mrf.mxu0
    %v572 = vadd.f32 %v183, %v571
    %573 = vdwg.mxu0
    %v574 = vmax.f32 %v383, 0.0
    %v575 = vmax.f32 %v385, 0.0
    %v576 = vmax.f32 %v496, 0.0
    %v577 = vmax.f32 %v498, 0.0
    %v578 = vmax.f32 %v387, 0.0
    %v579 = vmax.f32 %v389, 0.0
    %v580 = vmax.f32 %v500, 0.0
    %v581 = vmax.f32 %v502, 0.0
    %v582 = vmax.f32 %v393, 0.0
    %v583 = vmax.f32 %v395, 0.0
    %v584 = vmax.f32 %v506, 0.0
    %v585 = vmax.f32 %v508, 0.0
    %v586 = vmax.f32 %v397, 0.0
    %v587 = vmax.f32 %v399, 0.0
    %v588 = vmax.f32 %v510, 0.0
    %v589 = vmax.f32 %v512, 0.0
    %v590 = vmax.f32 %v403, 0.0
    %v591 = vmax.f32 %v405, 0.0
    %v592 = vmax.f32 %v516, 0.0
    %v593 = vmax.f32 %v518, 0.0
    %v594 = vmax.f32 %v407, 0.0
    %v595 = vmax.f32 %v409, 0.0
    %v596 = vmax.f32 %v520, 0.0
    %v597 = vmax.f32 %v522, 0.0
    %v598 = vmax.f32 %v413, 0.0
    %v599 = vmax.f32 %v415, 0.0
    %v600 = vmax.f32 %v526, 0.0
    %v601 = vmax.f32 %v528, 0.0
    %v602 = vmax.f32 %v417, 0.0
    %v603 = vmax.f32 %v419, 0.0
    %v604 = vmax.f32 %v530, 0.0
    %v605 = vmax.f32 %v532, 0.0
    %v606 = vmax.f32 %v423, 0.0
    %v607 = vmax.f32 %v425, 0.0
    %v608 = vmax.f32 %v536, 0.0
    %v609 = vmax.f32 %v538, 0.0
    %v610 = vmax.f32 %v427, 0.0
    %v611 = vmax.f32 %v429, 0.0
    %v612 = vmax.f32 %v540, 0.0
    %v613 = vmax.f32 %v542, 0.0
    %v614 = vmax.f32 %v433, 0.0
    %v615 = vmax.f32 %v435, 0.0
    %v616 = vmax.f32 %v546, 0.0
    %v617 = vmax.f32 %v548, 0.0
    %v618 = vmax.f32 %v437, 0.0
    %v619 = vmax.f32 %v439, 0.0
    %v620 = vmax.f32 %v550, 0.0
    %v621 = vmax.f32 %v552, 0.0
    %v622 = vmax.f32 %v443, 0.0
    %v623 = vmax.f32 %v445, 0.0
    %v624 = vmax.f32 %v556, 0.0
    %v625 = vmax.f32 %v558, 0.0
    %v626 = vmax.f32 %v447, 0.0
    %v627 = vmax.f32 %v449, 0.0
    %v628 = vmax.f32 %v560, 0.0
    %v629 = vmax.f32 %v562, 0.0
    %v630 = vmax.f32 %v453, 0.0
    %v631 = vmax.f32 %v455, 0.0
    %v632 = vmax.f32 %v566, 0.0
    %v633 = vmax.f32 %v568, 0.0
    %v634 = vmax.f32 %v457, 0.0
    %v635 = vmax.f32 %v459, 0.0
    %v636 = vmax.f32 %v570, 0.0
    %v637 = vmax.f32 %v572, 0.0
    %v638 = vpack.c.bf16 %v578, %v574
    %v639 = vpack.c.bf16 %v579, %v575
    %v640 = vpack.c.bf16 %v580, %v576
    %v641 = vpack.c.bf16 %v581, %v577
    %v642 = vpack.c.bf16 %v586, %v582
    %v643 = vpack.c.bf16 %v587, %v583
    %v644 = vpack.c.bf16 %v588, %v584
    %v645 = vpack.c.bf16 %v589, %v585
    %v646 = vpack.c.bf16 %v594, %v590
    %v647 = vpack.c.bf16 %v595, %v591
    %v648 = vpack.c.bf16 %v596, %v592
    %v649 = vpack.c.bf16 %v597, %v593
    %v650 = vpack.c.bf16 %v602, %v598
    %v651 = vpack.c.bf16 %v603, %v599
    %v652 = vpack.c.bf16 %v604, %v600
    %v653 = vpack.c.bf16 %v605, %v601
    %v654 = vpack.c.bf16 %v610, %v606
    %v655 = vpack.c.bf16 %v611, %v607
    %v656 = vpack.c.bf16 %v612, %v608
    %v657 = vpack.c.bf16 %v613, %v609
    %v658 = vpack.c.bf16 %v618, %v614
    %v659 = vpack.c.bf16 %v619, %v615
    %v660 = vpack.c.bf16 %v620, %v616
    %v661 = vpack.c.bf16 %v621, %v617
    %v662 = vpack.c.bf16 %v626, %v622
    %v663 = vpack.c.bf16 %v627, %v623
    %v664 = vpack.c.bf16 %v628, %v624
    %v665 = vpack.c.bf16 %v629, %v625
    %v666 = vpack.c.bf16 %v634, %v630
    %v667 = vpack.c.bf16 %v635, %v631
    %v668 = vpack.c.bf16 %v636, %v632
    %v669 = vpack.c.bf16 %v637, %v633
    %v670 = vld [vmem:[#allocation9] sm:$0xff]
    %v671 = vld [vmem:[#allocation9 + $0x8] sm:$0xf]
    %v672 = vld [vmem:[#allocation9 + $0xc] sm:$0xff]
    %v673 = vld [vmem:[#allocation9 + $0x14] sm:$0xf]
    %v674 = vld [vmem:[#allocation9 + $0x18] sm:$0xff]
    %v675 = vld [vmem:[#allocation9 + $0x20] sm:$0xf]
    %v676 = vld [vmem:[#allocation9 + $0x24] sm:$0xff]
    %v677 = vld [vmem:[#allocation9 + $0x2c] sm:$0xf]
    %v678 = vld [vmem:[#allocation9 + $0x30] sm:$0xff]
    %v679 = vld [vmem:[#allocation9 + $0x38] sm:$0xf]
    %v680 = vld [vmem:[#allocation9 + $0x3c] sm:$0xff]
    %v681 = vld [vmem:[#allocation9 + $0x44] sm:$0xf]
    %v682 = vld [vmem:[#allocation9 + $0x48] sm:$0xff]
    %v683 = vld [vmem:[#allocation9 + $0x50] sm:$0xf]
    %v684 = vld [vmem:[#allocation9 + $0x54] sm:$0xff]
    %v685 = vld [vmem:[#allocation9 + $0x5c] sm:$0xf]
    %v686 = vld [vmem:[#allocation9 + $0x60] sm:$0xff]
    %v687 = vld [vmem:[#allocation9 + $0x68] sm:$0xf]
    %v688 = vld [vmem:[#allocation9 + $0x6c] sm:$0xff]
    %v689 = vld [vmem:[#allocation9 + $0x74] sm:$0xf]
    %v690 = vld [vmem:[#allocation9 + $0x78] sm:$0xff]
    %v691 = vld [vmem:[#allocation9 + $0x80] sm:$0xf]
    %v692 = vld [vmem:[#allocation9 + $0x84] sm:$0xff]
    %v693 = vld [vmem:[#allocation9 + $0x8c] sm:$0xf]
    %v694 = vld [vmem:[#allocation9 + $0x90] sm:$0xff]
    %v695 = vld [vmem:[#allocation9 + $0x98] sm:$0xf]
    %v696 = vld [vmem:[#allocation9 + $0x9c] sm:$0xff]
    %v697 = vld [vmem:[#allocation9 + $0xa4] sm:$0xf]
    %v698 = vld [vmem:[#allocation9 + $0xa8] sm:$0xff]
    %v699 = vld [vmem:[#allocation9 + $0xb0] sm:$0xf]
    %v700 = vld [vmem:[#allocation9 + $0xb4] sm:$0xff]
    %v701 = vld [vmem:[#allocation9 + $0xbc] sm:$0xf]
    %v702 = vld [vmem:[#allocation9 + $0xc0] sm:$0xff]
    %v703 = vld [vmem:[#allocation9 + $0xc8] sm:$0xf]
    %v704 = vld [vmem:[#allocation9 + $0xcc] sm:$0xff]
    %v705 = vld [vmem:[#allocation9 + $0xd4] sm:$0xf]
    %v706 = vld [vmem:[#allocation9 + $0xd8] sm:$0xff]
    %v707 = vld [vmem:[#allocation9 + $0xe0] sm:$0xf]
    %v708 = vld [vmem:[#allocation9 + $0xe4] sm:$0xff]
    %v709 = vld [vmem:[#allocation9 + $0xec] sm:$0xf]
    %v710 = vld [vmem:[#allocation9 + $0xf0] sm:$0xff]
    %v711 = vld [vmem:[#allocation9 + $0xf8] sm:$0xf]
    %v712 = vld [vmem:[#allocation9 + $0xfc] sm:$0xff]
    %v713 = vld [vmem:[#allocation9 + $0x104] sm:$0xf]
    %v714 = vld [vmem:[#allocation9 + $0x108] sm:$0xff]
    %v715 = vld [vmem:[#allocation9 + $0x110] sm:$0xf]
    %v716 = vld [vmem:[#allocation9 + $0x114] sm:$0xff]
    %v717 = vld [vmem:[#allocation9 + $0x11c] sm:$0xf]
    %v718 = vld [vmem:[#allocation9 + $0x120] sm:$0xff]
    %v719 = vld [vmem:[#allocation9 + $0x128] sm:$0xf]
    %v720 = vld [vmem:[#allocation9 + $0x12c] sm:$0xff]
    %v721 = vld [vmem:[#allocation9 + $0x134] sm:$0xf]
    %v722 = vld [vmem:[#allocation9 + $0x138] sm:$0xff]
    %v723 = vld [vmem:[#allocation9 + $0x140] sm:$0xf]
    %v724 = vld [vmem:[#allocation9 + $0x144] sm:$0xff]
    %v725 = vld [vmem:[#allocation9 + $0x14c] sm:$0xf]
    %v726 = vld [vmem:[#allocation9 + $0x150] sm:$0xff]
    %v727 = vld [vmem:[#allocation9 + $0x158] sm:$0xf]
    %v728 = vld [vmem:[#allocation9 + $0x15c] sm:$0xff]
    %v729 = vld [vmem:[#allocation9 + $0x164] sm:$0xf]
    %v730 = vld [vmem:[#allocation9 + $0x168] sm:$0xff]
    %v731 = vld [vmem:[#allocation9 + $0x170] sm:$0xf]
    %v732 = vld [vmem:[#allocation9 + $0x174] sm:$0xff]
    %v733 = vld [vmem:[#allocation9 + $0x17c] sm:$0xf]
    %v734 = vld [vmem:[#allocation9 + $0x180] sm:$0xff]
    %v735 = vld [vmem:[#allocation9 + $0x188] sm:$0xf]
    %v736 = vld [vmem:[#allocation9 + $0x18c] sm:$0xff]
    %v737 = vld [vmem:[#allocation9 + $0x194] sm:$0xf]
    %v738 = vld [vmem:[#allocation9 + $0x198] sm:$0xff]
    %v739 = vld [vmem:[#allocation9 + $0x1a0] sm:$0xf]
    %v740 = vld [vmem:[#allocation9 + $0x1a4] sm:$0xff]
    %v741 = vld [vmem:[#allocation9 + $0x1ac] sm:$0xf]
    %v742 = vld [vmem:[#allocation9 + $0x1b0] sm:$0xff]
    %v743 = vld [vmem:[#allocation9 + $0x1b8] sm:$0xf]
    %v744 = vld [vmem:[#allocation9 + $0x1bc] sm:$0xff]
    %v745 = vld [vmem:[#allocation9 + $0x1c4] sm:$0xf]
    %v746 = vld [vmem:[#allocation9 + $0x1c8] sm:$0xff]
    %v747 = vld [vmem:[#allocation9 + $0x1d0] sm:$0xf]
    %v748 = vld [vmem:[#allocation9 + $0x1d4] sm:$0xff]
    %v749 = vld [vmem:[#allocation9 + $0x1dc] sm:$0xf]
    %v750 = vld [vmem:[#allocation9 + $0x1e0] sm:$0xff]
    %v751 = vld [vmem:[#allocation9 + $0x1e8] sm:$0xf]
    %v752 = vld [vmem:[#allocation9 + $0x1ec] sm:$0xff]
    %v753 = vld [vmem:[#allocation9 + $0x1f4] sm:$0xf]
    %v754 = vld [vmem:[#allocation9 + $0x1f8] sm:$0xff]
    %v755 = vld [vmem:[#allocation9 + $0x200] sm:$0xf]
    %v756 = vld [vmem:[#allocation9 + $0x204] sm:$0xff]
    %v757 = vld [vmem:[#allocation9 + $0x20c] sm:$0xf]
    %v758 = vld [vmem:[#allocation9 + $0x210] sm:$0xff]
    %v759 = vld [vmem:[#allocation9 + $0x218] sm:$0xf]
    %v760 = vld [vmem:[#allocation9 + $0x21c] sm:$0xff]
    %v761 = vld [vmem:[#allocation9 + $0x224] sm:$0xf]
    %v762 = vld [vmem:[#allocation9 + $0x228] sm:$0xff]
    %v763 = vld [vmem:[#allocation9 + $0x230] sm:$0xf]
    %v764 = vld [vmem:[#allocation9 + $0x234] sm:$0xff]
    %v765 = vld [vmem:[#allocation9 + $0x23c] sm:$0xf]
    %v766 = vld [vmem:[#allocation9 + $0x240] sm:$0xff]
    %v767 = vld [vmem:[#allocation9 + $0x248] sm:$0xf]
    %v768 = vld [vmem:[#allocation9 + $0x24c] sm:$0xff]
    %v769 = vld [vmem:[#allocation9 + $0x254] sm:$0xf]
    %v770 = vld [vmem:[#allocation9 + $0x258] sm:$0xff]
    %v771 = vld [vmem:[#allocation9 + $0x260] sm:$0xf]
    %v772 = vld [vmem:[#allocation9 + $0x264] sm:$0xff]
    %v773 = vld [vmem:[#allocation9 + $0x26c] sm:$0xf]
    %v774 = vld [vmem:[#allocation9 + $0x270] sm:$0xff]
    %v775 = vld [vmem:[#allocation9 + $0x278] sm:$0xf]
    %v776 = vld [vmem:[#allocation9 + $0x27c] sm:$0xff]
    %v777 = vld [vmem:[#allocation9 + $0x284] sm:$0xf]
    %v778 = vld [vmem:[#allocation9 + $0x288] sm:$0xff]
    %v779 = vld [vmem:[#allocation9 + $0x290] sm:$0xf]
    %v780 = vld [vmem:[#allocation9 + $0x294] sm:$0xff]
    %v781 = vld [vmem:[#allocation9 + $0x29c] sm:$0xf]
    %v782 = vld [vmem:[#allocation9 + $0x2a0] sm:$0xff]
    %v783 = vld [vmem:[#allocation9 + $0x2a8] sm:$0xf]
    %v784 = vld [vmem:[#allocation9 + $0x2ac] sm:$0xff]
    %v785 = vld [vmem:[#allocation9 + $0x2b4] sm:$0xf]
    %v786 = vld [vmem:[#allocation9 + $0x2b8] sm:$0xff]
    %v787 = vld [vmem:[#allocation9 + $0x2c0] sm:$0xf]
    %v788 = vld [vmem:[#allocation9 + $0x2c4] sm:$0xff]
    %v789 = vld [vmem:[#allocation9 + $0x2cc] sm:$0xf]
    %v790 = vld [vmem:[#allocation9 + $0x2d0] sm:$0xff]
    %v791 = vld [vmem:[#allocation9 + $0x2d8] sm:$0xf]
    %v792 = vld [vmem:[#allocation9 + $0x2dc] sm:$0xff]
    %v793 = vld [vmem:[#allocation9 + $0x2e4] sm:$0xf]
    %v794 = vld [vmem:[#allocation9 + $0x2e8] sm:$0xff]
    %v795 = vld [vmem:[#allocation9 + $0x2f0] sm:$0xf]
    %v796 = vld [vmem:[#allocation9 + $0x2f4] sm:$0xff]
    %v797 = vld [vmem:[#allocation9 + $0x2fc] sm:$0xf]
    %v798 = vld [vmem:[#allocation11] sm:$0xff]
    %v799 = vld [vmem:[#allocation11 + $0x8] sm:$0xf]
    %v800 = vld [vmem:[#allocation11 + $0xc] sm:$0xff]
    %v801 = vld [vmem:[#allocation11 + $0x14] sm:$0xf]
    %v802 = vld [vmem:[#allocation11 + $0x18] sm:$0xff]
    %v803 = vld [vmem:[#allocation11 + $0x20] sm:$0xf]
    %v804 = vld [vmem:[#allocation11 + $0x24] sm:$0xff]
    %v805 = vld [vmem:[#allocation11 + $0x2c] sm:$0xf]
    %v806 = vld [vmem:[#allocation11 + $0x30] sm:$0xff]
    %v807 = vld [vmem:[#allocation11 + $0x38] sm:$0xf]
    %v808 = vld [vmem:[#allocation11 + $0x3c] sm:$0xff]
    %v809 = vld [vmem:[#allocation11 + $0x44] sm:$0xf]
    %v810 = vld [vmem:[#allocation11 + $0x48] sm:$0xff]
    %v811 = vld [vmem:[#allocation11 + $0x50] sm:$0xf]
    %v812 = vld [vmem:[#allocation11 + $0x54] sm:$0xff]
    %v813 = vld [vmem:[#allocation11 + $0x5c] sm:$0xf]
    %v814 = vld [vmem:[#allocation11 + $0x60] sm:$0xff]
    %v815 = vld [vmem:[#allocation11 + $0x68] sm:$0xf]
    %v816 = vld [vmem:[#allocation11 + $0x6c] sm:$0xff]
    %v817 = vld [vmem:[#allocation11 + $0x74] sm:$0xf]
    %v818 = vld [vmem:[#allocation11 + $0x78] sm:$0xff]
    %v819 = vld [vmem:[#allocation11 + $0x80] sm:$0xf]
    %v820 = vld [vmem:[#allocation11 + $0x84] sm:$0xff]
    %v821 = vld [vmem:[#allocation11 + $0x8c] sm:$0xf]
    %v822 = vld [vmem:[#allocation11 + $0x90] sm:$0xff]
    %v823 = vld [vmem:[#allocation11 + $0x98] sm:$0xf]
    %v824 = vld [vmem:[#allocation11 + $0x9c] sm:$0xff]
    %v825 = vld [vmem:[#allocation11 + $0xa4] sm:$0xf]
    %v826 = vld [vmem:[#allocation11 + $0xa8] sm:$0xff]
    %v827 = vld [vmem:[#allocation11 + $0xb0] sm:$0xf]
    %v828 = vld [vmem:[#allocation11 + $0xb4] sm:$0xff]
    %v829 = vld [vmem:[#allocation11 + $0xbc] sm:$0xf]
    %v862 = vunpack.c.l.b16 %v798
    %v863 = vunpack.c.h.b16 %v798
    %v864 = vunpack.c.l.b16 %v799
    %v865 = vunpack.c.l.b16 %v800
    %v866 = vunpack.c.h.b16 %v800
    %v867 = vunpack.c.l.b16 %v801
    %v868 = vunpack.c.l.b16 %v802
    %v869 = vunpack.c.h.b16 %v802
    %v870 = vunpack.c.l.b16 %v803
    %v871 = vunpack.c.l.b16 %v804
    %v872 = vunpack.c.h.b16 %v804
    %v873 = vunpack.c.l.b16 %v805
    %v874 = vunpack.c.l.b16 %v806
    %v875 = vunpack.c.h.b16 %v806
    %v876 = vunpack.c.l.b16 %v807
    %v877 = vunpack.c.l.b16 %v808
    %v878 = vunpack.c.h.b16 %v808
    %v879 = vunpack.c.l.b16 %v809
    %v880 = vunpack.c.l.b16 %v810
    %v881 = vunpack.c.h.b16 %v810
    %v882 = vunpack.c.l.b16 %v811
    %v883 = vunpack.c.l.b16 %v812
    %v884 = vunpack.c.h.b16 %v812
    %v885 = vunpack.c.l.b16 %v813
    %v886 = vunpack.c.l.b16 %v814
    %v887 = vunpack.c.h.b16 %v814
    %v888 = vunpack.c.l.b16 %v815
    %v889 = vunpack.c.l.b16 %v816
    %v890 = vunpack.c.h.b16 %v816
    %v891 = vunpack.c.l.b16 %v817
    %v892 = vunpack.c.l.b16 %v818
    %v893 = vunpack.c.h.b16 %v818
    %v894 = vunpack.c.l.b16 %v819
    %v895 = vunpack.c.l.b16 %v820
    %v896 = vunpack.c.h.b16 %v820
    %v897 = vunpack.c.l.b16 %v821
    %v898 = vunpack.c.l.b16 %v822
    %v899 = vunpack.c.h.b16 %v822
    %v900 = vunpack.c.l.b16 %v823
    %v901 = vunpack.c.l.b16 %v824
    %v902 = vunpack.c.h.b16 %v824
    %v903 = vunpack.c.l.b16 %v825
    %v904 = vunpack.c.l.b16 %v826
    %v905 = vunpack.c.h.b16 %v826
    %v906 = vunpack.c.l.b16 %v827
    %v907 = vunpack.c.l.b16 %v828
    %v908 = vunpack.c.h.b16 %v828
    %v909 = vunpack.c.l.b16 %v829
    %v910 = vpack.c.b16 %v865, %v862
    %v911 = vpack.c.b16 %v866, %v863
    %v912 = vpack.c.b16 %v867, %v864
    %v913 = vpack.c.b16 %v871, %v868
    %v914 = vpack.c.b16 %v872, %v869
    %v915 = vpack.c.b16 %v873, %v870
    %v916 = vpack.c.b16 %v877, %v874
    %v917 = vpack.c.b16 %v878, %v875
    %v918 = vpack.c.b16 %v879, %v876
    %v919 = vpack.c.b16 %v883, %v880
    %v920 = vpack.c.b16 %v884, %v881
    %v921 = vpack.c.b16 %v885, %v882
    %v922 = vpack.c.b16 %v889, %v886
    %v923 = vpack.c.b16 %v890, %v887
    %v924 = vpack.c.b16 %v891, %v888
    %v925 = vpack.c.b16 %v895, %v892
    %v926 = vpack.c.b16 %v896, %v893
    %v927 = vpack.c.b16 %v897, %v894
    %v928 = vpack.c.b16 %v901, %v898
    %v929 = vpack.c.b16 %v902, %v899
    %v930 = vpack.c.b16 %v903, %v900
    %v931 = vpack.c.b16 %v907, %v904
    %v932 = vpack.c.b16 %v908, %v905
    %v933 = vpack.c.b16 %v909, %v906
    %958 = vmatprep.subr.bf16.mxu0 %v932
    %959 = vmatpush1.bf16.msra.mxu0 %v931
    %960 = vmatprep.subr.bf16.mxu0 %v929
    %961 = vmatpush1.bf16.msra.mxu0 %v928
    %962 = vmatprep.subr.bf16.mxu0 %v926
    %963 = vmatpush1.bf16.msra.mxu0 %v925
    %964 = vmatprep.subr.bf16.mxu0 %v923
    %965 = vmatpush1.bf16.msra.mxu0 %v922
    %966 = vmatprep.subr.bf16.mxu0 %v920
    %967 = vmatpush1.bf16.msra.mxu0 %v919
    %968 = vmatprep.subr.bf16.mxu0 %v917
    %969 = vmatpush1.bf16.msra.mxu0 %v916
    %970 = vmatprep.subr.bf16.mxu0 %v914
    %971 = vmatpush1.bf16.msra.mxu0 %v913
    %972 = vmatprep.subr.bf16.mxu0 %v911
    %973 = vmatpush1.bf16.msra.mxu0 %v910
    %974 = vmatprep.subr.bf16.mxu0 0
    %975 = vmatpush2.bf16.msra.mxu0 0
    %976 = vmatprep.subr.bf16.mxu0 0
    %977 = vmatpush2.bf16.msra.mxu0 0
    %978 = vmatprep.subr.bf16.mxu0 0
    %979 = vmatpush2.bf16.msra.mxu0 0
    %980 = vmatprep.subr.bf16.mxu0 0
    %981 = vmatpush2.bf16.msra.mxu0 0
    %982 = vmatprep.subr.bf16.mxu0 0
    %983 = vmatpush2.bf16.msra.mxu0 0
    %984 = vmatprep.subr.bf16.mxu0 0
    %985 = vmatpush2.bf16.msra.mxu0 0
    %986 = vmatprep.subr.bf16.mxu0 0
    %987 = vmatpush2.bf16.msra.mxu0 0
    %988 = vmatprep.subr.bf16.mxu0 0
    %989 = vmatpush2.bf16.msra.mxu0 0
    %990 = vmatprep.mubr.bf16.mxu0 0
    %991 = vmatmul.mubr.bf16.gmra.mxu0 %v126
    %v992 = vpop.f32.mrf.mxu0
    %v993 = vadd.f32 0.0, %v992
    %v994 = vpop.f32.mrf.mxu0
    %v995 = vadd.f32 0.0, %v994
    %v996 = vpop.f32.mrf.mxu0
    %v997 = vadd.f32 0.0, %v996
    %v998 = vpop.f32.mrf.mxu0
    %v999 = vadd.f32 0.0, %v998
    %1000 = vmatprep.mubr.bf16.mxu0 0
    %1001 = vmatmul.mubr.bf16.gmra.mxu0 %v127
    %v1002 = vpop.f32.mrf.mxu0
    %v1003 = vadd.f32 0.0, %v1002
    %v1004 = vpop.f32.mrf.mxu0
    %v1005 = vadd.f32 0.0, %v1004
    %v1006 = vpop.f32.mrf.mxu0
    %v1007 = vadd.f32 0.0, %v1006
    %v1008 = vpop.f32.mrf.mxu0
    %v1009 = vadd.f32 0.0, %v1008
    %1010 = vmatprep.mubr.bf16.mxu0 0
    %1011 = vmatmul.mubr.bf16.gmra.mxu0 %v128
    %v1012 = vpop.f32.mrf.mxu0
    %v1013 = vadd.f32 0.0, %v1012
    %v1014 = vpop.f32.mrf.mxu0
    %v1015 = vadd.f32 0.0, %v1014
    %v1016 = vpop.f32.mrf.mxu0
    %v1017 = vadd.f32 0.0, %v1016
    %v1018 = vpop.f32.mrf.mxu0
    %v1019 = vadd.f32 0.0, %v1018
    %1020 = vmatprep.mubr.bf16.mxu0 0
    %1021 = vmatmul.mubr.bf16.gmra.mxu0 %v129
    %v1022 = vpop.f32.mrf.mxu0
    %v1023 = vadd.f32 0.0, %v1022
    %v1024 = vpop.f32.mrf.mxu0
    %v1025 = vadd.f32 0.0, %v1024
    %v1026 = vpop.f32.mrf.mxu0
    %v1027 = vadd.f32 0.0, %v1026
    %v1028 = vpop.f32.mrf.mxu0
    %v1029 = vadd.f32 0.0, %v1028
    %1030 = vmatprep.mubr.bf16.mxu0 0
    %1031 = vmatmul.mubr.bf16.gmra.mxu0 %v130
    %v1032 = vpop.f32.mrf.mxu0
    %v1033 = vadd.f32 0.0, %v1032
    %v1034 = vpop.f32.mrf.mxu0
    %v1035 = vadd.f32 0.0, %v1034
    %v1036 = vpop.f32.mrf.mxu0
    %v1037 = vadd.f32 0.0, %v1036
    %v1038 = vpop.f32.mrf.mxu0
    %v1039 = vadd.f32 0.0, %v1038
    %1040 = vmatprep.mubr.bf16.mxu0 0
    %1041 = vmatmul.mubr.bf16.gmra.mxu0 %v131
    %v1042 = vpop.f32.mrf.mxu0
    %v1043 = vadd.f32 0.0, %v1042
    %v1044 = vpop.f32.mrf.mxu0
    %v1045 = vadd.f32 0.0, %v1044
    %v1046 = vpop.f32.mrf.mxu0
    %v1047 = vadd.f32 0.0, %v1046
    %v1048 = vpop.f32.mrf.mxu0
    %v1049 = vadd.f32 0.0, %v1048
    %1050 = vmatprep.mubr.bf16.mxu0 0
    %1051 = vmatmul.mubr.bf16.gmra.mxu0 %v132
    %v1052 = vpop.f32.mrf.mxu0
    %v1053 = vadd.f32 0.0, %v1052
    %v1054 = vpop.f32.mrf.mxu0
    %v1055 = vadd.f32 0.0, %v1054
    %v1056 = vpop.f32.mrf.mxu0
    %v1057 = vadd.f32 0.0, %v1056
    %v1058 = vpop.f32.mrf.mxu0
    %v1059 = vadd.f32 0.0, %v1058
    %1060 = vmatprep.mubr.bf16.mxu0 0
    %1061 = vmatmul.mubr.bf16.gmra.mxu0 %v133
    %v1062 = vpop.f32.mrf.mxu0
    %v1063 = vadd.f32 0.0, %v1062
    %v1064 = vpop.f32.mrf.mxu0
    %v1065 = vadd.f32 0.0, %v1064
    %v1066 = vpop.f32.mrf.mxu0
    %v1067 = vadd.f32 0.0, %v1066
    %v1068 = vpop.f32.mrf.mxu0
    %v1069 = vadd.f32 0.0, %v1068
    %1070 = vdwg.mxu0
    %1071 = vmatprep.subr.bf16.mxu0 0
    %1072 = vmatpush1.bf16.msra.mxu0 %v933
    %1073 = vmatprep.subr.bf16.mxu0 0
    %1074 = vmatpush1.bf16.msra.mxu0 %v930
    %1075 = vmatprep.subr.bf16.mxu0 0
    %1076 = vmatpush1.bf16.msra.mxu0 %v927
    %1077 = vmatprep.subr.bf16.mxu0 0
    %1078 = vmatpush1.bf16.msra.mxu0 %v924
    %1079 = vmatprep.subr.bf16.mxu0 0
    %1080 = vmatpush1.bf16.msra.mxu0 %v921
    %1081 = vmatprep.subr.bf16.mxu0 0
    %1082 = vmatpush1.bf16.msra.mxu0 %v918
    %1083 = vmatprep.subr.bf16.mxu0 0
    %1084 = vmatpush1.bf16.msra.mxu0 %v915
    %1085 = vmatprep.subr.bf16.mxu0 0
    %1086 = vmatpush1.bf16.msra.mxu0 %v912
    %1087 = vmatprep.subr.bf16.mxu0 0
    %1088 = vmatpush2.bf16.msra.mxu0 0
    %1089 = vmatprep.subr.bf16.mxu0 0
    %1090 = vmatpush2.bf16.msra.mxu0 0
    %1091 = vmatprep.subr.bf16.mxu0 0
    %1092 = vmatpush2.bf16.msra.mxu0 0
    %1093 = vmatprep.subr.bf16.mxu0 0
    %1094 = vmatpush2.bf16.msra.mxu0 0
    %1095 = vmatprep.subr.bf16.mxu0 0
    %1096 = vmatpush2.bf16.msra.mxu0 0
    %1097 = vmatprep.subr.bf16.mxu0 0
    %1098 = vmatpush2.bf16.msra.mxu0 0
    %1099 = vmatprep.subr.bf16.mxu0 0
    %1100 = vmatpush2.bf16.msra.mxu0 0
    %1101 = vmatprep.subr.bf16.mxu0 0
    %1102 = vmatpush2.bf16.msra.mxu0 0
    %1103 = vmatprep.mubr.bf16.mxu0 0
    %1104 = vmatmul.mubr.bf16.gmra.mxu0 %v126
    %v1105 = vpop.f32.mrf.mxu0
    %v1106 = vadd.f32 0.0, %v1105
    %v1107 = vpop.f32.mrf.mxu0
    %v1108 = vpop.f32.mrf.mxu0
    %v1109 = vadd.f32 0.0, %v1108
    %v1110 = vpop.f32.mrf.mxu0
    %1111 = vmatprep.mubr.bf16.mxu0 0
    %1112 = vmatmul.mubr.bf16.gmra.mxu0 %v127
    %v1113 = vpop.f32.mrf.mxu0
    %v1114 = vadd.f32 0.0, %v1113
    %v1115 = vpop.f32.mrf.mxu0
    %v1116 = vpop.f32.mrf.mxu0
    %v1117 = vadd.f32 0.0, %v1116
    %v1118 = vpop.f32.mrf.mxu0
    %1119 = vmatprep.mubr.bf16.mxu0 0
    %1120 = vmatmul.mubr.bf16.gmra.mxu0 %v128
    %v1121 = vpop.f32.mrf.mxu0
    %v1122 = vadd.f32 0.0, %v1121
    %v1123 = vpop.f32.mrf.mxu0
    %v1124 = vpop.f32.mrf.mxu0
    %v1125 = vadd.f32 0.0, %v1124
    %v1126 = vpop.f32.mrf.mxu0
    %1127 = vmatprep.mubr.bf16.mxu0 0
    %1128 = vmatmul.mubr.bf16.gmra.mxu0 %v129
    %v1129 = vpop.f32.mrf.mxu0
    %v1130 = vadd.f32 0.0, %v1129
    %v1131 = vpop.f32.mrf.mxu0
    %v1132 = vpop.f32.mrf.mxu0
    %v1133 = vadd.f32 0.0, %v1132
    %v1134 = vpop.f32.mrf.mxu0
    %1135 = vmatprep.mubr.bf16.mxu0 0
    %1136 = vmatmul.mubr.bf16.gmra.mxu0 %v130
    %v1137 = vpop.f32.mrf.mxu0
    %v1138 = vadd.f32 0.0, %v1137
    %v1139 = vpop.f32.mrf.mxu0
    %v1140 = vpop.f32.mrf.mxu0
    %v1141 = vadd.f32 0.0, %v1140
    %v1142 = vpop.f32.mrf.mxu0
    %1143 = vmatprep.mubr.bf16.mxu0 0
    %1144 = vmatmul.mubr.bf16.gmra.mxu0 %v131
    %v1145 = vpop.f32.mrf.mxu0
    %v1146 = vadd.f32 0.0, %v1145
    %v1147 = vpop.f32.mrf.mxu0
    %v1148 = vpop.f32.mrf.mxu0
    %v1149 = vadd.f32 0.0, %v1148
    %v1150 = vpop.f32.mrf.mxu0
    %1151 = vmatprep.mubr.bf16.mxu0 0
    %1152 = vmatmul.mubr.bf16.gmra.mxu0 %v132
    %v1153 = vpop.f32.mrf.mxu0
    %v1154 = vadd.f32 0.0, %v1153
    %v1155 = vpop.f32.mrf.mxu0
    %v1156 = vpop.f32.mrf.mxu0
    %v1157 = vadd.f32 0.0, %v1156
    %v1158 = vpop.f32.mrf.mxu0
    %1159 = vmatprep.mubr.bf16.mxu0 0
    %1160 = vmatmul.mubr.bf16.gmra.mxu0 %v133
    %v1161 = vpop.f32.mrf.mxu0
    %v1162 = vadd.f32 0.0, %v1161
    %v1163 = vpop.f32.mrf.mxu0
    %v1164 = vpop.f32.mrf.mxu0
    %v1165 = vadd.f32 0.0, %v1164
    %v1166 = vpop.f32.mrf.mxu0
    %1167 = vdwg.mxu0
    %v1296 = vunpack.c.l.b16 %v670
    %v1297 = vunpack.c.h.b16 %v670
    %v1298 = vunpack.c.l.b16 %v671
    %v1299 = vunpack.c.l.b16 %v672
    %v1300 = vunpack.c.h.b16 %v672
    %v1301 = vunpack.c.l.b16 %v673
    %v1302 = vunpack.c.l.b16 %v674
    %v1303 = vunpack.c.h.b16 %v674
    %v1304 = vunpack.c.l.b16 %v675
    %v1305 = vunpack.c.l.b16 %v676
    %v1306 = vunpack.c.h.b16 %v676
    %v1307 = vunpack.c.l.b16 %v677
    %v1308 = vunpack.c.l.b16 %v678
    %v1309 = vunpack.c.h.b16 %v678
    %v1310 = vunpack.c.l.b16 %v679
    %v1311 = vunpack.c.l.b16 %v680
    %v1312 = vunpack.c.h.b16 %v680
    %v1313 = vunpack.c.l.b16 %v681
    %v1314 = vunpack.c.l.b16 %v682
    %v1315 = vunpack.c.h.b16 %v682
    %v1316 = vunpack.c.l.b16 %v683
    %v1317 = vunpack.c.l.b16 %v684
    %v1318 = vunpack.c.h.b16 %v684
    %v1319 = vunpack.c.l.b16 %v685
    %v1320 = vunpack.c.l.b16 %v686
    %v1321 = vunpack.c.h.b16 %v686
    %v1322 = vunpack.c.l.b16 %v687
    %v1323 = vunpack.c.l.b16 %v688
    %v1324 = vunpack.c.h.b16 %v688
    %v1325 = vunpack.c.l.b16 %v689
    %v1326 = vunpack.c.l.b16 %v690
    %v1327 = vunpack.c.h.b16 %v690
    %v1328 = vunpack.c.l.b16 %v691
    %v1329 = vunpack.c.l.b16 %v692
    %v1330 = vunpack.c.h.b16 %v692
    %v1331 = vunpack.c.l.b16 %v693
    %v1332 = vunpack.c.l.b16 %v694
    %v1333 = vunpack.c.h.b16 %v694
    %v1334 = vunpack.c.l.b16 %v695
    %v1335 = vunpack.c.l.b16 %v696
    %v1336 = vunpack.c.h.b16 %v696
    %v1337 = vunpack.c.l.b16 %v697
    %v1338 = vunpack.c.l.b16 %v698
    %v1339 = vunpack.c.h.b16 %v698
    %v1340 = vunpack.c.l.b16 %v699
    %v1341 = vunpack.c.l.b16 %v700
    %v1342 = vunpack.c.h.b16 %v700
    %v1343 = vunpack.c.l.b16 %v701
    %v1344 = vunpack.c.l.b16 %v702
    %v1345 = vunpack.c.h.b16 %v702
    %v1346 = vunpack.c.l.b16 %v703
    %v1347 = vunpack.c.l.b16 %v704
    %v1348 = vunpack.c.h.b16 %v704
    %v1349 = vunpack.c.l.b16 %v705
    %v1350 = vunpack.c.l.b16 %v706
    %v1351 = vunpack.c.h.b16 %v706
    %v1352 = vunpack.c.l.b16 %v707
    %v1353 = vunpack.c.l.b16 %v708
    %v1354 = vunpack.c.h.b16 %v708
    %v1355 = vunpack.c.l.b16 %v709
    %v1356 = vunpack.c.l.b16 %v710
    %v1357 = vunpack.c.h.b16 %v710
    %v1358 = vunpack.c.l.b16 %v711
    %v1359 = vunpack.c.l.b16 %v712
    %v1360 = vunpack.c.h.b16 %v712
    %v1361 = vunpack.c.l.b16 %v713
    %v1362 = vunpack.c.l.b16 %v714
    %v1363 = vunpack.c.h.b16 %v714
    %v1364 = vunpack.c.l.b16 %v715
    %v1365 = vunpack.c.l.b16 %v716
    %v1366 = vunpack.c.h.b16 %v716
    %v1367 = vunpack.c.l.b16 %v717
    %v1368 = vunpack.c.l.b16 %v718
    %v1369 = vunpack.c.h.b16 %v718
    %v1370 = vunpack.c.l.b16 %v719
    %v1371 = vunpack.c.l.b16 %v720
    %v1372 = vunpack.c.h.b16 %v720
    %v1373 = vunpack.c.l.b16 %v721
    %v1374 = vunpack.c.l.b16 %v722
    %v1375 = vunpack.c.h.b16 %v722
    %v1376 = vunpack.c.l.b16 %v723
    %v1377 = vunpack.c.l.b16 %v724
    %v1378 = vunpack.c.h.b16 %v724
    %v1379 = vunpack.c.l.b16 %v725
    %v1380 = vunpack.c.l.b16 %v726
    %v1381 = vunpack.c.h.b16 %v726
    %v1382 = vunpack.c.l.b16 %v727
    %v1383 = vunpack.c.l.b16 %v728
    %v1384 = vunpack.c.h.b16 %v728
    %v1385 = vunpack.c.l.b16 %v729
    %v1386 = vunpack.c.l.b16 %v730
    %v1387 = vunpack.c.h.b16 %v730
    %v1388 = vunpack.c.l.b16 %v731
    %v1389 = vunpack.c.l.b16 %v732
    %v1390 = vunpack.c.h.b16 %v732
    %v1391 = vunpack.c.l.b16 %v733
    %v1392 = vunpack.c.l.b16 %v734
    %v1393 = vunpack.c.h.b16 %v734
    %v1394 = vunpack.c.l.b16 %v735
    %v1395 = vunpack.c.l.b16 %v736
    %v1396 = vunpack.c.h.b16 %v736
    %v1397 = vunpack.c.l.b16 %v737
    %v1398 = vunpack.c.l.b16 %v738
    %v1399 = vunpack.c.h.b16 %v738
    %v1400 = vunpack.c.l.b16 %v739
    %v1401 = vunpack.c.l.b16 %v740
    %v1402 = vunpack.c.h.b16 %v740
    %v1403 = vunpack.c.l.b16 %v741
    %v1404 = vunpack.c.l.b16 %v742
    %v1405 = vunpack.c.h.b16 %v742
    %v1406 = vunpack.c.l.b16 %v743
    %v1407 = vunpack.c.l.b16 %v744
    %v1408 = vunpack.c.h.b16 %v744
    %v1409 = vunpack.c.l.b16 %v745
    %v1410 = vunpack.c.l.b16 %v746
    %v1411 = vunpack.c.h.b16 %v746
    %v1412 = vunpack.c.l.b16 %v747
    %v1413 = vunpack.c.l.b16 %v748
    %v1414 = vunpack.c.h.b16 %v748
    %v1415 = vunpack.c.l.b16 %v749
    %v1416 = vunpack.c.l.b16 %v750
    %v1417 = vunpack.c.h.b16 %v750
    %v1418 = vunpack.c.l.b16 %v751
    %v1419 = vunpack.c.l.b16 %v752
    %v1420 = vunpack.c.h.b16 %v752
    %v1421 = vunpack.c.l.b16 %v753
    %v1422 = vunpack.c.l.b16 %v754
    %v1423 = vunpack.c.h.b16 %v754
    %v1424 = vunpack.c.l.b16 %v755
    %v1425 = vunpack.c.l.b16 %v756
    %v1426 = vunpack.c.h.b16 %v756
    %v1427 = vunpack.c.l.b16 %v757
    %v1428 = vunpack.c.l.b16 %v758
    %v1429 = vunpack.c.h.b16 %v758
    %v1430 = vunpack.c.l.b16 %v759
    %v1431 = vunpack.c.l.b16 %v760
    %v1432 = vunpack.c.h.b16 %v760
    %v1433 = vunpack.c.l.b16 %v761
    %v1434 = vunpack.c.l.b16 %v762
    %v1435 = vunpack.c.h.b16 %v762
    %v1436 = vunpack.c.l.b16 %v763
    %v1437 = vunpack.c.l.b16 %v764
    %v1438 = vunpack.c.h.b16 %v764
    %v1439 = vunpack.c.l.b16 %v765
    %v1440 = vunpack.c.l.b16 %v766
    %v1441 = vunpack.c.h.b16 %v766
    %v1442 = vunpack.c.l.b16 %v767
    %v1443 = vunpack.c.l.b16 %v768
    %v1444 = vunpack.c.h.b16 %v768
    %v1445 = vunpack.c.l.b16 %v769
    %v1446 = vunpack.c.l.b16 %v770
    %v1447 = vunpack.c.h.b16 %v770
    %v1448 = vunpack.c.l.b16 %v771
    %v1449 = vunpack.c.l.b16 %v772
    %v1450 = vunpack.c.h.b16 %v772
    %v1451 = vunpack.c.l.b16 %v773
    %v1452 = vunpack.c.l.b16 %v774
    %v1453 = vunpack.c.h.b16 %v774
    %v1454 = vunpack.c.l.b16 %v775
    %v1455 = vunpack.c.l.b16 %v776
    %v1456 = vunpack.c.h.b16 %v776
    %v1457 = vunpack.c.l.b16 %v777
    %v1458 = vunpack.c.l.b16 %v778
    %v1459 = vunpack.c.h.b16 %v778
    %v1460 = vunpack.c.l.b16 %v779
    %v1461 = vunpack.c.l.b16 %v780
    %v1462 = vunpack.c.h.b16 %v780
    %v1463 = vunpack.c.l.b16 %v781
    %v1464 = vunpack.c.l.b16 %v782
    %v1465 = vunpack.c.h.b16 %v782
    %v1466 = vunpack.c.l.b16 %v783
    %v1467 = vunpack.c.l.b16 %v784
    %v1468 = vunpack.c.h.b16 %v784
    %v1469 = vunpack.c.l.b16 %v785
    %v1470 = vunpack.c.l.b16 %v786
    %v1471 = vunpack.c.h.b16 %v786
    %v1472 = vunpack.c.l.b16 %v787
    %v1473 = vunpack.c.l.b16 %v788
    %v1474 = vunpack.c.h.b16 %v788
    %v1475 = vunpack.c.l.b16 %v789
    %v1476 = vunpack.c.l.b16 %v790
    %v1477 = vunpack.c.h.b16 %v790
    %v1478 = vunpack.c.l.b16 %v791
    %v1479 = vunpack.c.l.b16 %v792
    %v1480 = vunpack.c.h.b16 %v792
    %v1481 = vunpack.c.l.b16 %v793
    %v1482 = vunpack.c.l.b16 %v794
    %v1483 = vunpack.c.h.b16 %v794
    %v1484 = vunpack.c.l.b16 %v795
    %v1485 = vunpack.c.l.b16 %v796
    %v1486 = vunpack.c.h.b16 %v796
    %v1487 = vunpack.c.l.b16 %v797
    %v1488 = vpack.c.b16 %v1299, %v1296
    %v1489 = vpack.c.b16 %v1300, %v1297
    %v1490 = vpack.c.b16 %v1301, %v1298
    %v1491 = vpack.c.b16 %v1305, %v1302
    %v1492 = vpack.c.b16 %v1306, %v1303
    %v1493 = vpack.c.b16 %v1307, %v1304
    %v1494 = vpack.c.b16 %v1311, %v1308
    %v1495 = vpack.c.b16 %v1312, %v1309
    %v1496 = vpack.c.b16 %v1313, %v1310
    %v1497 = vpack.c.b16 %v1317, %v1314
    %v1498 = vpack.c.b16 %v1318, %v1315
    %v1499 = vpack.c.b16 %v1319, %v1316
    %v1500 = vpack.c.b16 %v1323, %v1320
    %v1501 = vpack.c.b16 %v1324, %v1321
    %v1502 = vpack.c.b16 %v1325, %v1322
    %v1503 = vpack.c.b16 %v1329, %v1326
    %v1504 = vpack.c.b16 %v1330, %v1327
    %v1505 = vpack.c.b16 %v1331, %v1328
    %v1506 = vpack.c.b16 %v1335, %v1332
    %v1507 = vpack.c.b16 %v1336, %v1333
    %v1508 = vpack.c.b16 %v1337, %v1334
    %v1509 = vpack.c.b16 %v1341, %v1338
    %v1510 = vpack.c.b16 %v1342, %v1339
    %v1511 = vpack.c.b16 %v1343, %v1340
    %v1512 = vpack.c.b16 %v1347, %v1344
    %v1513 = vpack.c.b16 %v1348, %v1345
    %v1514 = vpack.c.b16 %v1349, %v1346
    %v1515 = vpack.c.b16 %v1353, %v1350
    %v1516 = vpack.c.b16 %v1354, %v1351
    %v1517 = vpack.c.b16 %v1355, %v1352
    %v1518 = vpack.c.b16 %v1359, %v1356
    %v1519 = vpack.c.b16 %v1360, %v1357
    %v1520 = vpack.c.b16 %v1361, %v1358
    %v1521 = vpack.c.b16 %v1365, %v1362
    %v1522 = vpack.c.b16 %v1366, %v1363
    %v1523 = vpack.c.b16 %v1367, %v1364
    %v1524 = vpack.c.b16 %v1371, %v1368
    %v1525 = vpack.c.b16 %v1372, %v1369
    %v1526 = vpack.c.b16 %v1373, %v1370
    %v1527 = vpack.c.b16 %v1377, %v1374
    %v1528 = vpack.c.b16 %v1378, %v1375
    %v1529 = vpack.c.b16 %v1379, %v1376
    %v1530 = vpack.c.b16 %v1383, %v1380
    %v1531 = vpack.c.b16 %v1384, %v1381
    %v1532 = vpack.c.b16 %v1385, %v1382
    %v1533 = vpack.c.b16 %v1389, %v1386
    %v1534 = vpack.c.b16 %v1390, %v1387
    %v1535 = vpack.c.b16 %v1391, %v1388
    %v1536 = vpack.c.b16 %v1395, %v1392
    %v1537 = vpack.c.b16 %v1396, %v1393
    %v1538 = vpack.c.b16 %v1397, %v1394
    %v1539 = vpack.c.b16 %v1401, %v1398
    %v1540 = vpack.c.b16 %v1402, %v1399
    %v1541 = vpack.c.b16 %v1403, %v1400
    %v1542 = vpack.c.b16 %v1407, %v1404
    %v1543 = vpack.c.b16 %v1408, %v1405
    %v1544 = vpack.c.b16 %v1409, %v1406
    %v1545 = vpack.c.b16 %v1413, %v1410
    %v1546 = vpack.c.b16 %v1414, %v1411
    %v1547 = vpack.c.b16 %v1415, %v1412
    %v1548 = vpack.c.b16 %v1419, %v1416
    %v1549 = vpack.c.b16 %v1420, %v1417
    %v1550 = vpack.c.b16 %v1421, %v1418
    %v1551 = vpack.c.b16 %v1425, %v1422
    %v1552 = vpack.c.b16 %v1426, %v1423
    %v1553 = vpack.c.b16 %v1427, %v1424
    %v1554 = vpack.c.b16 %v1431, %v1428
    %v1555 = vpack.c.b16 %v1432, %v1429
    %v1556 = vpack.c.b16 %v1433, %v1430
    %v1557 = vpack.c.b16 %v1437, %v1434
    %v1558 = vpack.c.b16 %v1438, %v1435
    %v1559 = vpack.c.b16 %v1439, %v1436
    %v1560 = vpack.c.b16 %v1443, %v1440
    %v1561 = vpack.c.b16 %v1444, %v1441
    %v1562 = vpack.c.b16 %v1445, %v1442
    %v1563 = vpack.c.b16 %v1449, %v1446
    %v1564 = vpack.c.b16 %v1450, %v1447
    %v1565 = vpack.c.b16 %v1451, %v1448
    %v1566 = vpack.c.b16 %v1455, %v1452
    %v1567 = vpack.c.b16 %v1456, %v1453
    %v1568 = vpack.c.b16 %v1457, %v1454
    %v1569 = vpack.c.b16 %v1461, %v1458
    %v1570 = vpack.c.b16 %v1462, %v1459
    %v1571 = vpack.c.b16 %v1463, %v1460
    %v1572 = vpack.c.b16 %v1467, %v1464
    %v1573 = vpack.c.b16 %v1468, %v1465
    %v1574 = vpack.c.b16 %v1469, %v1466
    %v1575 = vpack.c.b16 %v1473, %v1470
    %v1576 = vpack.c.b16 %v1474, %v1471
    %v1577 = vpack.c.b16 %v1475, %v1472
    %v1578 = vpack.c.b16 %v1479, %v1476
    %v1579 = vpack.c.b16 %v1480, %v1477
    %v1580 = vpack.c.b16 %v1481, %v1478
    %v1581 = vpack.c.b16 %v1485, %v1482
    %v1582 = vpack.c.b16 %v1486, %v1483
    %v1583 = vpack.c.b16 %v1487, %v1484
    %1680 = vmatprep.subr.bf16.mxu0 %v1510
    %1681 = vmatpush1.bf16.msra.mxu0 %v1509
    %1682 = vmatprep.subr.bf16.mxu0 %v1507
    %1683 = vmatpush1.bf16.msra.mxu0 %v1506
    %1684 = vmatprep.subr.bf16.mxu0 %v1504
    %1685 = vmatpush1.bf16.msra.mxu0 %v1503
    %1686 = vmatprep.subr.bf16.mxu0 %v1501
    %1687 = vmatpush1.bf16.msra.mxu0 %v1500
    %1688 = vmatprep.subr.bf16.mxu0 %v1498
    %1689 = vmatpush1.bf16.msra.mxu0 %v1497
    %1690 = vmatprep.subr.bf16.mxu0 %v1495
    %1691 = vmatpush1.bf16.msra.mxu0 %v1494
    %1692 = vmatprep.subr.bf16.mxu0 %v1492
    %1693 = vmatpush1.bf16.msra.mxu0 %v1491
    %1694 = vmatprep.subr.bf16.mxu0 %v1489
    %1695 = vmatpush1.bf16.msra.mxu0 %v1488
    %1696 = vmatprep.subr.bf16.mxu0 %v1534
    %1697 = vmatpush2.bf16.msra.mxu0 %v1533
    %1698 = vmatprep.subr.bf16.mxu0 %v1531
    %1699 = vmatpush2.bf16.msra.mxu0 %v1530
    %1700 = vmatprep.subr.bf16.mxu0 %v1528
    %1701 = vmatpush2.bf16.msra.mxu0 %v1527
    %1702 = vmatprep.subr.bf16.mxu0 %v1525
    %1703 = vmatpush2.bf16.msra.mxu0 %v1524
    %1704 = vmatprep.subr.bf16.mxu0 %v1522
    %1705 = vmatpush2.bf16.msra.mxu0 %v1521
    %1706 = vmatprep.subr.bf16.mxu0 %v1519
    %1707 = vmatpush2.bf16.msra.mxu0 %v1518
    %1708 = vmatprep.subr.bf16.mxu0 %v1516
    %1709 = vmatpush2.bf16.msra.mxu0 %v1515
    %1710 = vmatprep.subr.bf16.mxu0 %v1513
    %1711 = vmatpush2.bf16.msra.mxu0 %v1512
    %1712 = vmatprep.mubr.bf16.mxu0 %v639
    %1713 = vmatmul.mubr.bf16.gmra.mxu0 %v638
    %v1714 = vpop.f32.mrf.mxu0
    %v1715 = vadd.f32 %v993, %v1714
    %v1716 = vpop.f32.mrf.mxu0
    %v1717 = vadd.f32 %v995, %v1716
    %v1718 = vpop.f32.mrf.mxu0
    %v1719 = vadd.f32 %v997, %v1718
    %v1720 = vpop.f32.mrf.mxu0
    %v1721 = vadd.f32 %v999, %v1720
    %1722 = vmatprep.mubr.bf16.mxu0 %v643
    %1723 = vmatmul.mubr.bf16.gmra.mxu0 %v642
    %v1724 = vpop.f32.mrf.mxu0
    %v1725 = vadd.f32 %v1003, %v1724
    %v1726 = vpop.f32.mrf.mxu0
    %v1727 = vadd.f32 %v1005, %v1726
    %v1728 = vpop.f32.mrf.mxu0
    %v1729 = vadd.f32 %v1007, %v1728
    %v1730 = vpop.f32.mrf.mxu0
    %v1731 = vadd.f32 %v1009, %v1730
    %1732 = vmatprep.mubr.bf16.mxu0 %v647
    %1733 = vmatmul.mubr.bf16.gmra.mxu0 %v646
    %v1734 = vpop.f32.mrf.mxu0
    %v1735 = vadd.f32 %v1013, %v1734
    %v1736 = vpop.f32.mrf.mxu0
    %v1737 = vadd.f32 %v1015, %v1736
    %v1738 = vpop.f32.mrf.mxu0
    %v1739 = vadd.f32 %v1017, %v1738
    %v1740 = vpop.f32.mrf.mxu0
    %v1741 = vadd.f32 %v1019, %v1740
    %1742 = vmatprep.mubr.bf16.mxu0 %v651
    %1743 = vmatmul.mubr.bf16.gmra.mxu0 %v650
    %v1744 = vpop.f32.mrf.mxu0
    %v1745 = vadd.f32 %v1023, %v1744
    %v1746 = vpop.f32.mrf.mxu0
    %v1747 = vadd.f32 %v1025, %v1746
    %v1748 = vpop.f32.mrf.mxu0
    %v1749 = vadd.f32 %v1027, %v1748
    %v1750 = vpop.f32.mrf.mxu0
    %v1751 = vadd.f32 %v1029, %v1750
    %1752 = vmatprep.mubr.bf16.mxu0 %v655
    %1753 = vmatmul.mubr.bf16.gmra.mxu0 %v654
    %v1754 = vpop.f32.mrf.mxu0
    %v1755 = vadd.f32 %v1033, %v1754
    %v1756 = vpop.f32.mrf.mxu0
    %v1757 = vadd.f32 %v1035, %v1756
    %v1758 = vpop.f32.mrf.mxu0
    %v1759 = vadd.f32 %v1037, %v1758
    %v1760 = vpop.f32.mrf.mxu0
    %v1761 = vadd.f32 %v1039, %v1760
    %1762 = vmatprep.mubr.bf16.mxu0 %v659
    %1763 = vmatmul.mubr.bf16.gmra.mxu0 %v658
    %v1764 = vpop.f32.mrf.mxu0
    %v1765 = vadd.f32 %v1043, %v1764
    %v1766 = vpop.f32.mrf.mxu0
    %v1767 = vadd.f32 %v1045, %v1766
    %v1768 = vpop.f32.mrf.mxu0
    %v1769 = vadd.f32 %v1047, %v1768
    %v1770 = vpop.f32.mrf.mxu0
    %v1771 = vadd.f32 %v1049, %v1770
    %1772 = vmatprep.mubr.bf16.mxu0 %v663
    %1773 = vmatmul.mubr.bf16.gmra.mxu0 %v662
    %v1774 = vpop.f32.mrf.mxu0
    %v1775 = vadd.f32 %v1053, %v1774
    %v1776 = vpop.f32.mrf.mxu0
    %v1777 = vadd.f32 %v1055, %v1776
    %v1778 = vpop.f32.mrf.mxu0
    %v1779 = vadd.f32 %v1057, %v1778
    %v1780 = vpop.f32.mrf.mxu0
    %v1781 = vadd.f32 %v1059, %v1780
    %1782 = vmatprep.mubr.bf16.mxu0 %v667
    %1783 = vmatmul.mubr.bf16.gmra.mxu0 %v666
    %v1784 = vpop.f32.mrf.mxu0
    %v1785 = vadd.f32 %v1063, %v1784
    %v1786 = vpop.f32.mrf.mxu0
    %v1787 = vadd.f32 %v1065, %v1786
    %v1788 = vpop.f32.mrf.mxu0
    %v1789 = vadd.f32 %v1067, %v1788
    %v1790 = vpop.f32.mrf.mxu0
    %v1791 = vadd.f32 %v1069, %v1790
    %1792 = vdwg.mxu0
    %1793 = vmatprep.subr.bf16.mxu0 %v1558
    %1794 = vmatpush1.bf16.msra.mxu0 %v1557
    %1795 = vmatprep.subr.bf16.mxu0 %v1555
    %1796 = vmatpush1.bf16.msra.mxu0 %v1554
    %1797 = vmatprep.subr.bf16.mxu0 %v1552
    %1798 = vmatpush1.bf16.msra.mxu0 %v1551
    %1799 = vmatprep.subr.bf16.mxu0 %v1549
    %1800 = vmatpush1.bf16.msra.mxu0 %v1548
    %1801 = vmatprep.subr.bf16.mxu0 %v1546
    %1802 = vmatpush1.bf16.msra.mxu0 %v1545
    %1803 = vmatprep.subr.bf16.mxu0 %v1543
    %1804 = vmatpush1.bf16.msra.mxu0 %v1542
    %1805 = vmatprep.subr.bf16.mxu0 %v1540
    %1806 = vmatpush1.bf16.msra.mxu0 %v1539
    %1807 = vmatprep.subr.bf16.mxu0 %v1537
    %1808 = vmatpush1.bf16.msra.mxu0 %v1536
    %1809 = vmatprep.subr.bf16.mxu0 %v1582
    %1810 = vmatpush2.bf16.msra.mxu0 %v1581
    %1811 = vmatprep.subr.bf16.mxu0 %v1579
    %1812 = vmatpush2.bf16.msra.mxu0 %v1578
    %1813 = vmatprep.subr.bf16.mxu0 %v1576
    %1814 = vmatpush2.bf16.msra.mxu0 %v1575
    %1815 = vmatprep.subr.bf16.mxu0 %v1573
    %1816 = vmatpush2.bf16.msra.mxu0 %v1572
    %1817 = vmatprep.subr.bf16.mxu0 %v1570
    %1818 = vmatpush2.bf16.msra.mxu0 %v1569
    %1819 = vmatprep.subr.bf16.mxu0 %v1567
    %1820 = vmatpush2.bf16.msra.mxu0 %v1566
    %1821 = vmatprep.subr.bf16.mxu0 %v1564
    %1822 = vmatpush2.bf16.msra.mxu0 %v1563
    %1823 = vmatprep.subr.bf16.mxu0 %v1561
    %1824 = vmatpush2.bf16.msra.mxu0 %v1560
    %1825 = vmatprep.mubr.bf16.mxu0 %v641
    %1826 = vmatmul.mubr.bf16.gmra.mxu0 %v640
    %v1827 = vpop.f32.mrf.mxu0
    %v1828 = vadd.f32 %v1715, %v1827
    %v1829 = vpop.f32.mrf.mxu0
    %v1830 = vadd.f32 %v1717, %v1829
    %v1831 = vpop.f32.mrf.mxu0
    %v1832 = vadd.f32 %v1719, %v1831
    %v1833 = vpop.f32.mrf.mxu0
    %v1834 = vadd.f32 %v1721, %v1833
    %1835 = vmatprep.mubr.bf16.mxu0 %v645
    %1836 = vmatmul.mubr.bf16.gmra.mxu0 %v644
    %v1837 = vpop.f32.mrf.mxu0
    %v1838 = vadd.f32 %v1725, %v1837
    %v1839 = vpop.f32.mrf.mxu0
    %v1840 = vadd.f32 %v1727, %v1839
    %v1841 = vpop.f32.mrf.mxu0
    %v1842 = vadd.f32 %v1729, %v1841
    %v1843 = vpop.f32.mrf.mxu0
    %v1844 = vadd.f32 %v1731, %v1843
    %1845 = vmatprep.mubr.bf16.mxu0 %v649
    %1846 = vmatmul.mubr.bf16.gmra.mxu0 %v648
    %v1847 = vpop.f32.mrf.mxu0
    %v1848 = vadd.f32 %v1735, %v1847
    %v1849 = vpop.f32.mrf.mxu0
    %v1850 = vadd.f32 %v1737, %v1849
    %v1851 = vpop.f32.mrf.mxu0
    %v1852 = vadd.f32 %v1739, %v1851
    %v1853 = vpop.f32.mrf.mxu0
    %v1854 = vadd.f32 %v1741, %v1853
    %1855 = vmatprep.mubr.bf16.mxu0 %v653
    %1856 = vmatmul.mubr.bf16.gmra.mxu0 %v652
    %v1857 = vpop.f32.mrf.mxu0
    %v1858 = vadd.f32 %v1745, %v1857
    %v1859 = vpop.f32.mrf.mxu0
    %v1860 = vadd.f32 %v1747, %v1859
    %v1861 = vpop.f32.mrf.mxu0
    %v1862 = vadd.f32 %v1749, %v1861
    %v1863 = vpop.f32.mrf.mxu0
    %v1864 = vadd.f32 %v1751, %v1863
    %1865 = vmatprep.mubr.bf16.mxu0 %v657
    %1866 = vmatmul.mubr.bf16.gmra.mxu0 %v656
    %v1867 = vpop.f32.mrf.mxu0
    %v1868 = vadd.f32 %v1755, %v1867
    %v1869 = vpop.f32.mrf.mxu0
    %v1870 = vadd.f32 %v1757, %v1869
    %v1871 = vpop.f32.mrf.mxu0
    %v1872 = vadd.f32 %v1759, %v1871
    %v1873 = vpop.f32.mrf.mxu0
    %v1874 = vadd.f32 %v1761, %v1873
    %1875 = vmatprep.mubr.bf16.mxu0 %v661
    %1876 = vmatmul.mubr.bf16.gmra.mxu0 %v660
    %v1877 = vpop.f32.mrf.mxu0
    %v1878 = vadd.f32 %v1765, %v1877
    %v1879 = vpop.f32.mrf.mxu0
    %v1880 = vadd.f32 %v1767, %v1879
    %v1881 = vpop.f32.mrf.mxu0
    %v1882 = vadd.f32 %v1769, %v1881
    %v1883 = vpop.f32.mrf.mxu0
    %v1884 = vadd.f32 %v1771, %v1883
    %1885 = vmatprep.mubr.bf16.mxu0 %v665
    %1886 = vmatmul.mubr.bf16.gmra.mxu0 %v664
    %v1887 = vpop.f32.mrf.mxu0
    %v1888 = vadd.f32 %v1775, %v1887
    %v1889 = vpop.f32.mrf.mxu0
    %v1890 = vadd.f32 %v1777, %v1889
    %v1891 = vpop.f32.mrf.mxu0
    %v1892 = vadd.f32 %v1779, %v1891
    %v1893 = vpop.f32.mrf.mxu0
    %v1894 = vadd.f32 %v1781, %v1893
    %1895 = vmatprep.mubr.bf16.mxu0 %v669
    %1896 = vmatmul.mubr.bf16.gmra.mxu0 %v668
    %v1897 = vpop.f32.mrf.mxu0
    %v1898 = vadd.f32 %v1785, %v1897
    %v1899 = vpop.f32.mrf.mxu0
    %v1900 = vadd.f32 %v1787, %v1899
    %v1901 = vpop.f32.mrf.mxu0
    %v1902 = vadd.f32 %v1789, %v1901
    %v1903 = vpop.f32.mrf.mxu0
    %v1904 = vadd.f32 %v1791, %v1903
    %1905 = vdwg.mxu0
    %1906 = vmatprep.subr.bf16.mxu0 0
    %1907 = vmatpush1.bf16.msra.mxu0 %v1511
    %1908 = vmatprep.subr.bf16.mxu0 0
    %1909 = vmatpush1.bf16.msra.mxu0 %v1508
    %1910 = vmatprep.subr.bf16.mxu0 0
    %1911 = vmatpush1.bf16.msra.mxu0 %v1505
    %1912 = vmatprep.subr.bf16.mxu0 0
    %1913 = vmatpush1.bf16.msra.mxu0 %v1502
    %1914 = vmatprep.subr.bf16.mxu0 0
    %1915 = vmatpush1.bf16.msra.mxu0 %v1499
    %1916 = vmatprep.subr.bf16.mxu0 0
    %1917 = vmatpush1.bf16.msra.mxu0 %v1496
    %1918 = vmatprep.subr.bf16.mxu0 0
    %1919 = vmatpush1.bf16.msra.mxu0 %v1493
    %1920 = vmatprep.subr.bf16.mxu0 0
    %1921 = vmatpush1.bf16.msra.mxu0 %v1490
    %1922 = vmatprep.subr.bf16.mxu0 0
    %1923 = vmatpush2.bf16.msra.mxu0 %v1535
    %1924 = vmatprep.subr.bf16.mxu0 0
    %1925 = vmatpush2.bf16.msra.mxu0 %v1532
    %1926 = vmatprep.subr.bf16.mxu0 0
    %1927 = vmatpush2.bf16.msra.mxu0 %v1529
    %1928 = vmatprep.subr.bf16.mxu0 0
    %1929 = vmatpush2.bf16.msra.mxu0 %v1526
    %1930 = vmatprep.subr.bf16.mxu0 0
    %1931 = vmatpush2.bf16.msra.mxu0 %v1523
    %1932 = vmatprep.subr.bf16.mxu0 0
    %1933 = vmatpush2.bf16.msra.mxu0 %v1520
    %1934 = vmatprep.subr.bf16.mxu0 0
    %1935 = vmatpush2.bf16.msra.mxu0 %v1517
    %1936 = vmatprep.subr.bf16.mxu0 0
    %1937 = vmatpush2.bf16.msra.mxu0 %v1514
    %1938 = vmatprep.mubr.bf16.mxu0 %v639
    %1939 = vmatmul.mubr.bf16.gmra.mxu0 %v638
    %v1940 = vpop.f32.mrf.mxu0
    %v1941 = vadd.f32 %v1106, %v1940
    %v1942 = vpop.f32.mrf.mxu0
    %v1943 = vpop.f32.mrf.mxu0
    %v1944 = vadd.f32 %v1109, %v1943
    %v1945 = vpop.f32.mrf.mxu0
    %1946 = vmatprep.mubr.bf16.mxu0 %v643
    %1947 = vmatmul.mubr.bf16.gmra.mxu0 %v642
    %v1948 = vpop.f32.mrf.mxu0
    %v1949 = vadd.f32 %v1114, %v1948
    %v1950 = vpop.f32.mrf.mxu0
    %v1951 = vpop.f32.mrf.mxu0
    %v1952 = vadd.f32 %v1117, %v1951
    %v1953 = vpop.f32.mrf.mxu0
    %1954 = vmatprep.mubr.bf16.mxu0 %v647
    %1955 = vmatmul.mubr.bf16.gmra.mxu0 %v646
    %v1956 = vpop.f32.mrf.mxu0
    %v1957 = vadd.f32 %v1122, %v1956
    %v1958 = vpop.f32.mrf.mxu0
    %v1959 = vpop.f32.mrf.mxu0
    %v1960 = vadd.f32 %v1125, %v1959
    %v1961 = vpop.f32.mrf.mxu0
    %1962 = vmatprep.mubr.bf16.mxu0 %v651
    %1963 = vmatmul.mubr.bf16.gmra.mxu0 %v650
    %v1964 = vpop.f32.mrf.mxu0
    %v1965 = vadd.f32 %v1130, %v1964
    %v1966 = vpop.f32.mrf.mxu0
    %v1967 = vpop.f32.mrf.mxu0
    %v1968 = vadd.f32 %v1133, %v1967
    %v1969 = vpop.f32.mrf.mxu0
    %1970 = vmatprep.mubr.bf16.mxu0 %v655
    %1971 = vmatmul.mubr.bf16.gmra.mxu0 %v654
    %v1972 = vpop.f32.mrf.mxu0
    %v1973 = vadd.f32 %v1138, %v1972
    %v1974 = vpop.f32.mrf.mxu0
    %v1975 = vpop.f32.mrf.mxu0
    %v1976 = vadd.f32 %v1141, %v1975
    %v1977 = vpop.f32.mrf.mxu0
    %1978 = vmatprep.mubr.bf16.mxu0 %v659
    %1979 = vmatmul.mubr.bf16.gmra.mxu0 %v658
    %v1980 = vpop.f32.mrf.mxu0
    %v1981 = vadd.f32 %v1146, %v1980
    %v1982 = vpop.f32.mrf.mxu0
    %v1983 = vpop.f32.mrf.mxu0
    %v1984 = vadd.f32 %v1149, %v1983
    %v1985 = vpop.f32.mrf.mxu0
    %1986 = vmatprep.mubr.bf16.mxu0 %v663
    %1987 = vmatmul.mubr.bf16.gmra.mxu0 %v662
    %v1988 = vpop.f32.mrf.mxu0
    %v1989 = vadd.f32 %v1154, %v1988
    %v1990 = vpop.f32.mrf.mxu0
    %v1991 = vpop.f32.mrf.mxu0
    %v1992 = vadd.f32 %v1157, %v1991
    %v1993 = vpop.f32.mrf.mxu0
    %1994 = vmatprep.mubr.bf16.mxu0 %v667
    %1995 = vmatmul.mubr.bf16.gmra.mxu0 %v666
    %v1996 = vpop.f32.mrf.mxu0
    %v1997 = vadd.f32 %v1162, %v1996
    %v1998 = vpop.f32.mrf.mxu0
    %v1999 = vpop.f32.mrf.mxu0
    %v2000 = vadd.f32 %v1165, %v1999
    %v2001 = vpop.f32.mrf.mxu0
    %2002 = vdwg.mxu0
    %2003 = vmatprep.subr.bf16.mxu0 0
    %2004 = vmatpush1.bf16.msra.mxu0 %v1559
    %2005 = vmatprep.subr.bf16.mxu0 0
    %2006 = vmatpush1.bf16.msra.mxu0 %v1556
    %2007 = vmatprep.subr.bf16.mxu0 0
    %2008 = vmatpush1.bf16.msra.mxu0 %v1553
    %2009 = vmatprep.subr.bf16.mxu0 0
    %2010 = vmatpush1.bf16.msra.mxu0 %v1550
    %2011 = vmatprep.subr.bf16.mxu0 0
    %2012 = vmatpush1.bf16.msra.mxu0 %v1547
    %2013 = vmatprep.subr.bf16.mxu0 0
    %2014 = vmatpush1.bf16.msra.mxu0 %v1544
    %2015 = vmatprep.subr.bf16.mxu0 0
    %2016 = vmatpush1.bf16.msra.mxu0 %v1541
    %2017 = vmatprep.subr.bf16.mxu0 0
    %2018 = vmatpush1.bf16.msra.mxu0 %v1538
    %2019 = vmatprep.subr.bf16.mxu0 0
    %2020 = vmatpush2.bf16.msra.mxu0 %v1583
    %2021 = vmatprep.subr.bf16.mxu0 0
    %2022 = vmatpush2.bf16.msra.mxu0 %v1580
    %2023 = vmatprep.subr.bf16.mxu0 0
    %2024 = vmatpush2.bf16.msra.mxu0 %v1577
    %2025 = vmatprep.subr.bf16.mxu0 0
    %2026 = vmatpush2.bf16.msra.mxu0 %v1574
    %2027 = vmatprep.subr.bf16.mxu0 0
    %2028 = vmatpush2.bf16.msra.mxu0 %v1571
    %2029 = vmatprep.subr.bf16.mxu0 0
    %2030 = vmatpush2.bf16.msra.mxu0 %v1568
    %2031 = vmatprep.subr.bf16.mxu0 0
    %2032 = vmatpush2.bf16.msra.mxu0 %v1565
    %2033 = vmatprep.subr.bf16.mxu0 0
    %2034 = vmatpush2.bf16.msra.mxu0 %v1562
    %2035 = vmatprep.mubr.bf16.mxu0 %v641
    %2036 = vmatmul.mubr.bf16.gmra.mxu0 %v640
    %v2037 = vpop.f32.mrf.mxu0
    %v2038 = vadd.f32 %v1941, %v2037
    %v2039 = vpop.f32.mrf.mxu0
    %v2040 = vpop.f32.mrf.mxu0
    %v2041 = vadd.f32 %v1944, %v2040
    %v2042 = vpop.f32.mrf.mxu0
    %2043 = vmatprep.mubr.bf16.mxu0 %v645
    %2044 = vmatmul.mubr.bf16.gmra.mxu0 %v644
    %v2045 = vpop.f32.mrf.mxu0
    %v2046 = vadd.f32 %v1949, %v2045
    %v2047 = vpop.f32.mrf.mxu0
    %v2048 = vpop.f32.mrf.mxu0
    %v2049 = vadd.f32 %v1952, %v2048
    %v2050 = vpop.f32.mrf.mxu0
    %2051 = vmatprep.mubr.bf16.mxu0 %v649
    %2052 = vmatmul.mubr.bf16.gmra.mxu0 %v648
    %v2053 = vpop.f32.mrf.mxu0
    %v2054 = vadd.f32 %v1957, %v2053
    %v2055 = vpop.f32.mrf.mxu0
    %v2056 = vpop.f32.mrf.mxu0
    %v2057 = vadd.f32 %v1960, %v2056
    %v2058 = vpop.f32.mrf.mxu0
    %2059 = vmatprep.mubr.bf16.mxu0 %v653
    %2060 = vmatmul.mubr.bf16.gmra.mxu0 %v652
    %v2061 = vpop.f32.mrf.mxu0
    %v2062 = vadd.f32 %v1965, %v2061
    %v2063 = vpop.f32.mrf.mxu0
    %v2064 = vpop.f32.mrf.mxu0
    %v2065 = vadd.f32 %v1968, %v2064
    %v2066 = vpop.f32.mrf.mxu0
    %2067 = vmatprep.mubr.bf16.mxu0 %v657
    %2068 = vmatmul.mubr.bf16.gmra.mxu0 %v656
    %v2069 = vpop.f32.mrf.mxu0
    %v2070 = vadd.f32 %v1973, %v2069
    %v2071 = vpop.f32.mrf.mxu0
    %v2072 = vpop.f32.mrf.mxu0
    %v2073 = vadd.f32 %v1976, %v2072
    %v2074 = vpop.f32.mrf.mxu0
    %2075 = vmatprep.mubr.bf16.mxu0 %v661
    %2076 = vmatmul.mubr.bf16.gmra.mxu0 %v660
    %v2077 = vpop.f32.mrf.mxu0
    %v2078 = vadd.f32 %v1981, %v2077
    %v2079 = vpop.f32.mrf.mxu0
    %v2080 = vpop.f32.mrf.mxu0
    %v2081 = vadd.f32 %v1984, %v2080
    %v2082 = vpop.f32.mrf.mxu0
    %2083 = vmatprep.mubr.bf16.mxu0 %v665
    %2084 = vmatmul.mubr.bf16.gmra.mxu0 %v664
    %v2085 = vpop.f32.mrf.mxu0
    %v2086 = vadd.f32 %v1989, %v2085
    %v2087 = vpop.f32.mrf.mxu0
    %v2088 = vpop.f32.mrf.mxu0
    %v2089 = vadd.f32 %v1992, %v2088
    %v2090 = vpop.f32.mrf.mxu0
    %2091 = vmatprep.mubr.bf16.mxu0 %v669
    %2092 = vmatmul.mubr.bf16.gmra.mxu0 %v668
    %v2093 = vpop.f32.mrf.mxu0
    %v2094 = vadd.f32 %v1997, %v2093
    %v2095 = vpop.f32.mrf.mxu0
    %v2096 = vpop.f32.mrf.mxu0
    %v2097 = vadd.f32 %v2000, %v2096
    %v2098 = vpop.f32.mrf.mxu0
    %2099 = vdwg.mxu0
    %v2100 = vld [vmem:[#allocation12] sm:$0x7]
    %v2102 = vlaneseq
    %v2103 = vshrl.u32 %v2102, 7
    %v2104 = vsub.s32 0, %v2103
    %v2105 = vrot.slane %v2100, %v2104
    %v2106 = vlaneseq
    %v2107 = vshrl.u32 %v2106, 7
    %v2108 = vsub.s32 1, %v2107
    %v2109 = vrot.slane %v2100, %v2108
    %v2110 = vlaneseq
    %v2111 = vshrl.u32 %v2110, 7
    %v2112 = vsub.s32 2, %v2111
    %v2113 = vrot.slane %v2100, %v2112
    %v2117 = vadd.f32 %v1828, %v2105
    %v2118 = vadd.f32 %v1830, %v2109
    %v2119 = vadd.f32 %v2038, %v2113
    %v2120 = vadd.f32 %v1832, %v2105
    %v2121 = vadd.f32 %v1834, %v2109
    %v2122 = vadd.f32 %v2041, %v2113
    %v2123 = vadd.f32 %v1838, %v2105
    %v2124 = vadd.f32 %v1840, %v2109
    %v2125 = vadd.f32 %v2046, %v2113
    %v2126 = vadd.f32 %v1842, %v2105
    %v2127 = vadd.f32 %v1844, %v2109
    %v2128 = vadd.f32 %v2049, %v2113
    %v2129 = vadd.f32 %v1848, %v2105
    %v2130 = vadd.f32 %v1850, %v2109
    %v2131 = vadd.f32 %v2054, %v2113
    %v2132 = vadd.f32 %v1852, %v2105
    %v2133 = vadd.f32 %v1854, %v2109
    %v2134 = vadd.f32 %v2057, %v2113
    %v2135 = vadd.f32 %v1858, %v2105
    %v2136 = vadd.f32 %v1860, %v2109
    %v2137 = vadd.f32 %v2062, %v2113
    %v2138 = vadd.f32 %v1862, %v2105
    %v2139 = vadd.f32 %v1864, %v2109
    %v2140 = vadd.f32 %v2065, %v2113
    %v2141 = vadd.f32 %v1868, %v2105
    %v2142 = vadd.f32 %v1870, %v2109
    %v2143 = vadd.f32 %v2070, %v2113
    %v2144 = vadd.f32 %v1872, %v2105
    %v2145 = vadd.f32 %v1874, %v2109
    %v2146 = vadd.f32 %v2073, %v2113
    %v2147 = vadd.f32 %v1878, %v2105
    %v2148 = vadd.f32 %v1880, %v2109
    %v2149 = vadd.f32 %v2078, %v2113
    %v2150 = vadd.f32 %v1882, %v2105
    %v2151 = vadd.f32 %v1884, %v2109
    %v2152 = vadd.f32 %v2081, %v2113
    %v2153 = vadd.f32 %v1888, %v2105
    %v2154 = vadd.f32 %v1890, %v2109
    %v2155 = vadd.f32 %v2086, %v2113
    %v2156 = vadd.f32 %v1892, %v2105
    %v2157 = vadd.f32 %v1894, %v2109
    %v2158 = vadd.f32 %v2089, %v2113
    %v2159 = vadd.f32 %v1898, %v2105
    %v2160 = vadd.f32 %v1900, %v2109
    %v2161 = vadd.f32 %v2094, %v2113
    %v2162 = vadd.f32 %v1902, %v2105
    %v2163 = vadd.f32 %v1904, %v2109
    %v2164 = vadd.f32 %v2097, %v2113
    %v2165 = vmax.f32 %v2117, 0.0
    %v2166 = vmax.f32 %v2118, 0.0
    %v2167 = vmax.f32 %v2119, 0.0
    %v2168 = vmax.f32 %v2120, 0.0
    %v2169 = vmax.f32 %v2121, 0.0
    %v2170 = vmax.f32 %v2122, 0.0
    %v2171 = vmax.f32 %v2123, 0.0
    %v2172 = vmax.f32 %v2124, 0.0
    %v2173 = vmax.f32 %v2125, 0.0
    %v2174 = vmax.f32 %v2126, 0.0
    %v2175 = vmax.f32 %v2127, 0.0
    %v2176 = vmax.f32 %v2128, 0.0
    %v2177 = vmax.f32 %v2129, 0.0
    %v2178 = vmax.f32 %v2130, 0.0
    %v2179 = vmax.f32 %v2131, 0.0
    %v2180 = vmax.f32 %v2132, 0.0
    %v2181 = vmax.f32 %v2133, 0.0
    %v2182 = vmax.f32 %v2134, 0.0
    %v2183 = vmax.f32 %v2135, 0.0
    %v2184 = vmax.f32 %v2136, 0.0
    %v2185 = vmax.f32 %v2137, 0.0
    %v2186 = vmax.f32 %v2138, 0.0
    %v2187 = vmax.f32 %v2139, 0.0
    %v2188 = vmax.f32 %v2140, 0.0
    %v2189 = vmax.f32 %v2141, 0.0
    %v2190 = vmax.f32 %v2142, 0.0
    %v2191 = vmax.f32 %v2143, 0.0
    %v2192 = vmax.f32 %v2144, 0.0
    %v2193 = vmax.f32 %v2145, 0.0
    %v2194 = vmax.f32 %v2146, 0.0
    %v2195 = vmax.f32 %v2147, 0.0
    %v2196 = vmax.f32 %v2148, 0.0
    %v2197 = vmax.f32 %v2149, 0.0
    %v2198 = vmax.f32 %v2150, 0.0
    %v2199 = vmax.f32 %v2151, 0.0
    %v2200 = vmax.f32 %v2152, 0.0
    %v2201 = vmax.f32 %v2153, 0.0
    %v2202 = vmax.f32 %v2154, 0.0
    %v2203 = vmax.f32 %v2155, 0.0
    %v2204 = vmax.f32 %v2156, 0.0
    %v2205 = vmax.f32 %v2157, 0.0
    %v2206 = vmax.f32 %v2158, 0.0
    %v2207 = vmax.f32 %v2159, 0.0
    %v2208 = vmax.f32 %v2160, 0.0
    %v2209 = vmax.f32 %v2161, 0.0
    %v2210 = vmax.f32 %v2162, 0.0
    %v2211 = vmax.f32 %v2163, 0.0
    %v2212 = vmax.f32 %v2164, 0.0
    %2213 = vxpose.xlu0.b32.start [1/16] %v2165, 128
    %2214 = vxpose.xlu0.b32.cont [2/16] %v2168, 128
    %2215 = vxpose.xlu0.b32.cont [3/16] %v2171, 128
    %2216 = vxpose.xlu0.b32.cont [4/16] %v2174, 128
    %2217 = vxpose.xlu0.b32.cont [5/16] %v2177, 128
    %2218 = vxpose.xlu0.b32.cont [6/16] %v2180, 128
    %2219 = vxpose.xlu0.b32.cont [7/16] %v2183, 128
    %2220 = vxpose.xlu0.b32.cont [8/16] %v2186, 128
    %2221 = vxpose.xlu0.b32.cont [9/16] %v2189, 128
    %2222 = vxpose.xlu0.b32.cont [10/16] %v2192, 128
    %2223 = vxpose.xlu0.b32.cont [11/16] %v2195, 128
    %2224 = vxpose.xlu0.b32.cont [12/16] %v2198, 128
    %2225 = vxpose.xlu0.b32.cont [13/16] %v2201, 128
    %2226 = vxpose.xlu0.b32.cont [14/16] %v2204, 128
    %2227 = vxpose.xlu0.b32.cont [15/16] %v2207, 128
    %2228 = vxpose.xlu0.b32.end [16/16] %v2210, 128
    %v2229 = vpop.trf.xlu0
    %v2230 = vpop.trf.xlu0
    %v2231 = vpop.trf.xlu0
    %v2232 = vpop.trf.xlu0
    %v2233 = vpop.trf.xlu0
    %v2234 = vpop.trf.xlu0
    %v2235 = vpop.trf.xlu0
    %v2236 = vpop.trf.xlu0
    %v2237 = vpop.trf.xlu0
    %v2238 = vpop.trf.xlu0
    %v2239 = vpop.trf.xlu0
    %v2240 = vpop.trf.xlu0
    %v2241 = vpop.trf.xlu0
    %v2242 = vpop.trf.xlu0
    %v2243 = vpop.trf.xlu0
    %v2244 = vpop.trf.xlu0
    %2245 = vxpose.xlu0.b32.start [1/16] %v2166, 128
    %2246 = vxpose.xlu0.b32.cont [2/16] %v2169, 128
    %2247 = vxpose.xlu0.b32.cont [3/16] %v2172, 128
    %2248 = vxpose.xlu0.b32.cont [4/16] %v2175, 128
    %2249 = vxpose.xlu0.b32.cont [5/16] %v2178, 128
    %2250 = vxpose.xlu0.b32.cont [6/16] %v2181, 128
    %2251 = vxpose.xlu0.b32.cont [7/16] %v2184, 128
    %2252 = vxpose.xlu0.b32.cont [8/16] %v2187, 128
    %2253 = vxpose.xlu0.b32.cont [9/16] %v2190, 128
    %2254 = vxpose.xlu0.b32.cont [10/16] %v2193, 128
    %2255 = vxpose.xlu0.b32.cont [11/16] %v2196, 128
    %2256 = vxpose.xlu0.b32.cont [12/16] %v2199, 128
    %2257 = vxpose.xlu0.b32.cont [13/16] %v2202, 128
    %2258 = vxpose.xlu0.b32.cont [14/16] %v2205, 128
    %2259 = vxpose.xlu0.b32.cont [15/16] %v2208, 128
    %2260 = vxpose.xlu0.b32.end [16/16] %v2211, 128
    %v2261 = vpop.trf.xlu0
    %v2262 = vpop.trf.xlu0
    %v2263 = vpop.trf.xlu0
    %v2264 = vpop.trf.xlu0
    %v2265 = vpop.trf.xlu0
    %v2266 = vpop.trf.xlu0
    %v2267 = vpop.trf.xlu0
    %v2268 = vpop.trf.xlu0
    %v2269 = vpop.trf.xlu0
    %v2270 = vpop.trf.xlu0
    %v2271 = vpop.trf.xlu0
    %v2272 = vpop.trf.xlu0
    %v2273 = vpop.trf.xlu0
    %v2274 = vpop.trf.xlu0
    %v2275 = vpop.trf.xlu0
    %v2276 = vpop.trf.xlu0
    %2277 = vxpose.xlu0.b32.start [1/16] %v2167, 128
    %2278 = vxpose.xlu0.b32.cont [2/16] %v2170, 128
    %2279 = vxpose.xlu0.b32.cont [3/16] %v2173, 128
    %2280 = vxpose.xlu0.b32.cont [4/16] %v2176, 128
    %2281 = vxpose.xlu0.b32.cont [5/16] %v2179, 128
    %2282 = vxpose.xlu0.b32.cont [6/16] %v2182, 128
    %2283 = vxpose.xlu0.b32.cont [7/16] %v2185, 128
    %2284 = vxpose.xlu0.b32.cont [8/16] %v2188, 128
    %2285 = vxpose.xlu0.b32.cont [9/16] %v2191, 128
    %2286 = vxpose.xlu0.b32.cont [10/16] %v2194, 128
    %2287 = vxpose.xlu0.b32.cont [11/16] %v2197, 128
    %2288 = vxpose.xlu0.b32.cont [12/16] %v2200, 128
    %2289 = vxpose.xlu0.b32.cont [13/16] %v2203, 128
    %2290 = vxpose.xlu0.b32.cont [14/16] %v2206, 128
    %2291 = vxpose.xlu0.b32.cont [15/16] %v2209, 128
    %2292 = vxpose.xlu0.b32.end [16/16] %v2212, 128
    %v2293 = vpop.trf.xlu0
    %v2294 = vpop.trf.xlu0
    %v2295 = vpop.trf.xlu0
    %v2296 = vpop.trf.xlu0
    %v2297 = vpop.trf.xlu0
    %v2298 = vpop.trf.xlu0
    %v2299 = vpop.trf.xlu0
    %v2300 = vpop.trf.xlu0
    %v2301 = vpop.trf.xlu0
    %v2302 = vpop.trf.xlu0
    %v2303 = vpop.trf.xlu0
    %v2304 = vpop.trf.xlu0
    %v2305 = vpop.trf.xlu0
    %v2306 = vpop.trf.xlu0
    %v2307 = vpop.trf.xlu0
    %v2308 = vpop.trf.xlu0
    %v2309 = vpack.c.bf16 %v2230, %v2229
    %v2310 = vpack.c.bf16 %v2232, %v2231
    %v2311 = vpack.c.bf16 %v2234, %v2233
    %v2312 = vpack.c.bf16 %v2236, %v2235
    %v2313 = vpack.c.bf16 %v2238, %v2237
    %v2314 = vpack.c.bf16 %v2240, %v2239
    %v2315 = vpack.c.bf16 %v2242, %v2241
    %v2316 = vpack.c.bf16 %v2244, %v2243
    %v2317 = vpack.c.bf16 %v2262, %v2261
    %v2318 = vpack.c.bf16 %v2264, %v2263
    %v2319 = vpack.c.bf16 %v2266, %v2265
    %v2320 = vpack.c.bf16 %v2268, %v2267
    %v2321 = vpack.c.bf16 %v2270, %v2269
    %v2322 = vpack.c.bf16 %v2272, %v2271
    %v2323 = vpack.c.bf16 %v2274, %v2273
    %v2324 = vpack.c.bf16 %v2276, %v2275
    %v2325 = vpack.c.bf16 %v2294, %v2293
    %v2326 = vpack.c.bf16 %v2296, %v2295
    %v2327 = vpack.c.bf16 %v2298, %v2297
    %v2328 = vpack.c.bf16 %v2300, %v2299
    %v2329 = vpack.c.bf16 %v2302, %v2301
    %v2330 = vpack.c.bf16 %v2304, %v2303
    %v2331 = vpack.c.bf16 %v2306, %v2305
    %v2332 = vpack.c.bf16 %v2308, %v2307
    %v2333 = vld [vmem:[%s6] sm:$0xff]
    %v2334 = vld [vmem:[%s6 + $0x8] sm:$0xf]
    %s2335 = sld [smem:[#allocation2]]
    %v2336 = vstv %s2335
    %v2339 = vunpack.c.l.b16 %v2333
    %v2340 = vunpack.c.h.b16 %v2333
    %v2341 = vunpack.c.l.b16 %v2334
    %v2342 = vpack.c.b16 %v2339, %v2339
    %v2343 = vpack.c.b16 %v2340, %v2340
    %v2344 = vpack.c.b16 %v2341, %v2341
    %2348 = vmatprep.subr.bf16.mxu0 0
    %2349 = vmatpush1.bf16.msra.mxu0 %v2316
    %2350 = vmatprep.subr.bf16.mxu0 0
    %2351 = vmatpush1.bf16.msra.mxu0 %v2315
    %2352 = vmatprep.subr.bf16.mxu0 0
    %2353 = vmatpush1.bf16.msra.mxu0 %v2314
    %2354 = vmatprep.subr.bf16.mxu0 0
    %2355 = vmatpush1.bf16.msra.mxu0 %v2313
    %2356 = vmatprep.subr.bf16.mxu0 0
    %2357 = vmatpush1.bf16.msra.mxu0 %v2312
    %2358 = vmatprep.subr.bf16.mxu0 0
    %2359 = vmatpush1.bf16.msra.mxu0 %v2311
    %2360 = vmatprep.subr.bf16.mxu0 0
    %2361 = vmatpush1.bf16.msra.mxu0 %v2310
    %2362 = vmatprep.subr.bf16.mxu0 0
    %2363 = vmatpush1.bf16.msra.mxu0 %v2309
    %2364 = vmatprep.subr.bf16.mxu0 0
    %2365 = vmatpush2.bf16.msra.mxu0 %v2324
    %2366 = vmatprep.subr.bf16.mxu0 0
    %2367 = vmatpush2.bf16.msra.mxu0 %v2323
    %2368 = vmatprep.subr.bf16.mxu0 0
    %2369 = vmatpush2.bf16.msra.mxu0 %v2322
    %2370 = vmatprep.subr.bf16.mxu0 0
    %2371 = vmatpush2.bf16.msra.mxu0 %v2321
    %2372 = vmatprep.subr.bf16.mxu0 0
    %2373 = vmatpush2.bf16.msra.mxu0 %v2320
    %2374 = vmatprep.subr.bf16.mxu0 0
    %2375 = vmatpush2.bf16.msra.mxu0 %v2319
    %2376 = vmatprep.subr.bf16.mxu0 0
    %2377 = vmatpush2.bf16.msra.mxu0 %v2318
    %2378 = vmatprep.subr.bf16.mxu0 0
    %2379 = vmatpush2.bf16.msra.mxu0 %v2317
    %2380 = vmatprep.mubr.bf16.mxu0 %v2343
    %2381 = vmatmul.mubr.bf16.gmra.mxu0 %v2342
    %v2382 = vpop.f32.mrf.mxu0
    %v2383 = vadd.f32 %v2336, %v2382
    %v2384 = vpop.f32.mrf.mxu0
    %v2385 = vpop.f32.mrf.mxu0
    %v2386 = vpop.f32.mrf.mxu0
    %2387 = vdwg.mxu0
    %2388 = vmatprep.subr.bf16.mxu0 0
    %2389 = vmatpush1.bf16.msra.mxu0 %v2332
    %2390 = vmatprep.subr.bf16.mxu0 0
    %2391 = vmatpush1.bf16.msra.mxu0 %v2331
    %2392 = vmatprep.subr.bf16.mxu0 0
    %2393 = vmatpush1.bf16.msra.mxu0 %v2330
    %2394 = vmatprep.subr.bf16.mxu0 0
    %2395 = vmatpush1.bf16.msra.mxu0 %v2329
    %2396 = vmatprep.subr.bf16.mxu0 0
    %2397 = vmatpush1.bf16.msra.mxu0 %v2328
    %2398 = vmatprep.subr.bf16.mxu0 0
    %2399 = vmatpush1.bf16.msra.mxu0 %v2327
    %2400 = vmatprep.subr.bf16.mxu0 0
    %2401 = vmatpush1.bf16.msra.mxu0 %v2326
    %2402 = vmatprep.subr.bf16.mxu0 0
    %2403 = vmatpush1.bf16.msra.mxu0 %v2325
    %2404 = vmatprep.subr.bf16.mxu0 0
    %2405 = vmatpush2.bf16.msra.mxu0 0
    %2406 = vmatprep.subr.bf16.mxu0 0
    %2407 = vmatpush2.bf16.msra.mxu0 0
    %2408 = vmatprep.subr.bf16.mxu0 0
    %2409 = vmatpush2.bf16.msra.mxu0 0
    %2410 = vmatprep.subr.bf16.mxu0 0
    %2411 = vmatpush2.bf16.msra.mxu0 0
    %2412 = vmatprep.subr.bf16.mxu0 0
    %2413 = vmatpush2.bf16.msra.mxu0 0
    %2414 = vmatprep.subr.bf16.mxu0 0
    %2415 = vmatpush2.bf16.msra.mxu0 0
    %2416 = vmatprep.subr.bf16.mxu0 0
    %2417 = vmatpush2.bf16.msra.mxu0 0
    %2418 = vmatprep.subr.bf16.mxu0 0
    %2419 = vmatpush2.bf16.msra.mxu0 0
    %2420 = vmatprep.mubr.bf16.mxu0 0
    %2421 = vmatmul.mubr.bf16.gmra.mxu0 %v2344
    %v2422 = vpop.f32.mrf.mxu0
    %v2423 = vadd.f32 %v2383, %v2422
    %v2424 = vpop.f32.mrf.mxu0
    %v2425 = vpop.f32.mrf.mxu0
    %v2426 = vpop.f32.mrf.mxu0
    %2427 = vdwg.mxu0
    %2428 = vst [vmem:[#allocation14] sm:$0xff] %v2423
    // Predicated region
    $region58: #{tpu_custom_call.1} parent=1 // pred_check
      _
    $region59: #{tpu_custom_call.1} parent=1 // pred_check_branch
      %2430 = sbr.rel (0) target = $region61
    $region60: #{tpu_custom_call.1} parent=1 // pred_region
      %s2432 = ssub.s32 128, 128
      %2433 = vsyncadd [#allocation5], %s2432
      %s2435 = sshll.u32 [#allocation14], 4
      %s2436 = int_to_ptr.vmem [resolvable:$true] %s2435
      %2438 = dma.vmem_to_hbm [thread:$0]  %s2436, 128, %s8, [#allocation5]
    $region61: #{tpu_custom_call.1} parent=1 // pred_fallthru
      _
    // Predicated region
    $region62: #{tpu_custom_call.1} parent=1 // pred_check
      _
    $region63: #{tpu_custom_call.1} parent=1 // pred_check_branch
      %2440 = sbr.rel (0) target = $region65
    $region64: #{tpu_custom_call.1} parent=1 // pred_region
      %2441 = dma.done [#allocation5], 128
    $region65: #{tpu_custom_call.1} parent=1 // pred_fallthru
      _
    %2442 = vsyncpa [#allocation4], 1
    %2443 = vsyncpa [#allocation7], 1
    %2444 = vsyncpa [#allocation10], 1
    %2445 = vsyncpa [#allocation13], 1
    %2446 = vsyncpa [#allocation5], 1

</llo_original>
